<compile_context>
chip_gen: v7x
topology: tpu7x:2x2x1
jax: 0.10.0
libtpu: 0.0.40
codegen_flags: <defaults>
</compile_context>

<pallas_src>
import functools

import jax
import jax.numpy as jnp
import numpy as np
from jax.experimental import pallas as pl
from jax.experimental.pallas import tpu as pltpu


def _covid_kernel(n_layers, S, B, H, *refs):
    # refs: scal(SMEM,(4,)), xT(L,B), E(B,B*4H), b0_tiled(1,B*4H),
    #       w_hh_0 .. w_hh_{L-1} (H,4H),
    #       [w_ih_l (H,4H), b_l (1,4H)] for l = 1..L-1,
    #       w_lin(1,H), out(B,1)
    G = 4 * H
    scal_ref = refs[0]
    xT_ref = refs[1]
    e_ref = refs[2]
    b0t_ref = refs[3]
    whh_refs = refs[4:4 + n_layers]
    up_refs = refs[4 + n_layers:4 + n_layers + 2 * (n_layers - 1)]
    wlin_ref = refs[4 + n_layers + 2 * (n_layers - 1)]
    out_ref = refs[5 + n_layers + 2 * (n_layers - 1)]

    cw0 = scal_ref[0]
    cw1 = scal_ref[1]
    cb = scal_ref[2]
    lb = scal_ref[3]

    # ---- one-time preamble --------------------------------------------------
    xT = xT_ref[...]                                       # (L, B)
    convT = cw0 * xT[:S, :] + cw1 * xT[1:S + 1, :] + cb    # (S, B) time-major conv

    # Hoisted layer-0 input-gate contribution (+ bias) for every time step:
    #   gates_x[:, t*4H:(t+1)*4H] = convT[:, t] * w_ih_0_row + (b_ih0 + b_hh0)
    gates_x = (jnp.dot(convT, e_ref[...], preferred_element_type=jnp.float32)
               + b0t_ref[...])                             # (S, B*4H)

    whh = [whh_refs[l][...] for l in range(n_layers)]      # (H, 4H) each
    wih_up = [up_refs[2 * (l - 1)][...] for l in range(1, n_layers)]
    b_up = [up_refs[2 * (l - 1) + 1][...] for l in range(1, n_layers)]

    h = [jnp.zeros((S, H), jnp.float32) for _ in range(n_layers)]
    c = [jnp.zeros((S, H), jnp.float32) for _ in range(n_layers)]

    # Which (time step, row) pairs feed `.view(S, B, H)[-1]` (static Python).
    pairs = [(r // S, r % S) for r in range(B * S - B, B * S)]
    needed_ts = {p[0] for p in pairs}
    snaps = {}

    def lstm_cell(gates, c_prev):
        # One full-width sigmoid + one narrow tanh (PyTorch gate order i,f,g,o).
        s_all = jax.nn.sigmoid(gates)                      # (S, 4H)
        g_g = jnp.tanh(gates[:, 2 * H:3 * H])
        i_g = s_all[:, 0:H]
        f_g = s_all[:, H:2 * H]
        o_g = s_all[:, 3 * H:4 * H]
        c_new = f_g * c_prev + i_g * g_g
        h_new = o_g * jnp.tanh(c_new)
        return h_new, c_new

    # LSTM time axis == torch batch axis B; B=8 so a static unroll is fine.
    # TODO(synk): switch to lax.fori_loop(..., unroll=True) if B grows past ~16.
    for t in range(B):
        # Recurrent terms for *all* layers from previous-step state only:
        # issued up-front so they pipeline through the MXU off the EUP chain.
        rec = None
        if t > 0:
            rec = [jnp.dot(h[l], whh[l], preferred_element_type=jnp.float32)
                   for l in range(n_layers)]

        # ---- layer 0 (input_size == 1; contribution precomputed above) -----
        gates0 = gates_x[:, t * G:(t + 1) * G]
        if t > 0:
            gates0 = gates0 + rec[0]
        h[0], c[0] = lstm_cell(gates0, c[0])

        # ---- upper layers ----------------------------------------------------
        layer_in = h[0]
        for l in range(1, n_layers):
            gates = (jnp.dot(layer_in, wih_up[l - 1],
                             preferred_element_type=jnp.float32) + b_up[l - 1])
            if t > 0:
                gates = gates + rec[l]
            h[l], c[l] = lstm_cell(gates, c[l])
            layer_in = h[l]

        if t in needed_ts:
            snaps[t] = h[n_layers - 1]

    # last_time_step = lstm_out.view(S, B, H)[-1]  ==  last B rows of the flat
    # (B*S, H) buffer; assemble from at most a few contiguous row slices.
    runs = []
    for tt, ss in pairs:
        if runs and runs[-1][0] == tt and runs[-1][2] == ss:
            runs[-1] = (tt, runs[-1][1], ss + 1)
        else:
            runs.append((tt, ss, ss + 1))
    parts = [snaps[tt][s0:s1, :] for tt, s0, s1 in runs]
    last = parts[0] if len(parts) == 1 else jnp.concatenate(parts, axis=0)  # (B, H)

    # Final Linear(H, 1): VPU multiply + lane reduction.
    y = jnp.sum(last * wlin_ref[...], axis=-1, keepdims=True) + lb
    out_ref[...] = y                                       # (B, 1)


def covid_predictor_forward(sequences, params, *, n_hidden, seq_len, n_layers):
    """sequences: (B, seq_len, 1) float32 (n_features must be 1, as PyTorch's views require)."""
    B = sequences.shape[0]
    L = seq_len                 # n_features == 1  =>  flattened length == seq_len
    S = seq_len - 1
    H = n_hidden
    G = 4 * H

    xT = jnp.transpose(sequences.reshape(B, L).astype(jnp.float32), (1, 0))   # (L, B)

    scal = jnp.stack([params["conv_w"][0], params["conv_w"][1],
                      params["conv_b"], params["lin_b"]]).astype(jnp.float32)  # SMEM scalars

    # One-time wrapper-side weight prep: expansion matrix so one MXU pass yields
    # every time step's layer-0 gate contribution, 128-lane-aligned per step.
    w0_row = params["w_ih_0"].reshape(1, G)                                    # (1, 4H)
    E = jnp.kron(jnp.eye(B, dtype=jnp.float32), w0_row)                        # (B, B*4H)
    b0_tiled = jnp.tile(params["b_0"], (1, B))                                 # (1, B*4H)

    args = [scal, xT, E, b0_tiled]
    args += [params[f"w_hh_{l}"] for l in range(n_layers)]
    for l in range(1, n_layers):
        args += [params[f"w_ih_{l}"], params[f"b_{l}"]]
    args.append(params["w_lin"].reshape(1, H))

    in_specs = [pl.BlockSpec(memory_space=pltpu.MemorySpace.SMEM)]
    in_specs += [pl.BlockSpec(memory_space=pltpu.MemorySpace.VMEM)] * (len(args) - 1)

    # Advisory cost hint: microsecond-scale kernel.
    flops = (2 * S * B * B * G                       # hoisted input-gate matmul
             + 2 * (B - 1) * n_layers * S * H * G    # recurrent matmuls (t>0)
             + 2 * B * (n_layers - 1) * S * H * G    # upper-layer input matmuls
             + 12 * B * n_layers * S * H + 4 * B * H)
    transcendentals = B * n_layers * (S * G + 2 * S * H)
    bytes_accessed = 4 * (L * B + B * B * G + B * G + n_layers * H * G
                          + (n_layers - 1) * (H * G + G) + H + 4 + B)

    kern = functools.partial(_covid_kernel, n_layers, S, B, H)
    return pl.pallas_call(
        kern,
        out_shape=jax.ShapeDtypeStruct((B, 1), jnp.float32),
        in_specs=in_specs,
        out_specs=pl.BlockSpec(memory_space=pltpu.MemorySpace.VMEM),
        compiler_params=pltpu.CompilerParams(vmem_limit_bytes=8 * 1024 * 1024),
        cost_estimate=pl.CostEstimate(flops=flops,
                                      transcendentals=transcendentals,
                                      bytes_accessed=bytes_accessed),
    )(*args)


def init_params(key, n_features, n_hidden, n_layers):
    H = n_hidden
    keys = jax.random.split(key, 4 + 4 * n_layers)
    p = {}
    p["conv_w"] = 0.3 * jax.random.normal(keys[0], (2,), jnp.float32)
    p["conv_b"] = 0.1 * jax.random.normal(keys[1], (), jnp.float32)
    for l in range(n_layers):
        in_dim = n_features if l == 0 else H
        k0, k1, k2, k3 = keys[2 + 4 * l: 6 + 4 * l]
        w_ih = 0.2 * jax.random.normal(k0, (4 * H, in_dim), jnp.float32)   # PyTorch layout
        w_hh = 0.2 * jax.random.normal(k1, (4 * H, H), jnp.float32)
        b_ih = 0.1 * jax.random.normal(k2, (4 * H,), jnp.float32)
        b_hh = 0.1 * jax.random.normal(k3, (4 * H,), jnp.float32)
        p[f"w_ih_{l}"] = jnp.transpose(w_ih)                                # (in, 4H)
        p[f"w_hh_{l}"] = jnp.transpose(w_hh)                                # (H, 4H)
        p[f"b_{l}"] = (b_ih + b_hh).reshape(1, 4 * H)
    p["w_lin"] = 0.2 * jax.random.normal(keys[2 + 4 * n_layers], (H, 1), jnp.float32)
    p["lin_b"] = 0.1 * jax.random.normal(keys[3 + 4 * n_layers], (), jnp.float32)
    return p


def reference_forward(sequences, params, *, n_hidden, seq_len, n_layers):
    """Pure-JAX reference reproducing the exact PyTorch semantics (for validation)."""
    B = sequences.shape[0]
    S = seq_len - 1
    H = n_hidden
    x = sequences.reshape(B, seq_len).astype(jnp.float32)
    w0, w1 = params["conv_w"][0], params["conv_w"][1]
    conv = w0 * x[:, :S] + w1 * x[:, 1:S + 1] + params["conv_b"]            # (B, S)
    h = [jnp.zeros((S, H), jnp.float32) for _ in range(n_layers)]
    c = [jnp.zeros((S, H), jnp.float32) for _ in range(n_layers)]
    outs = []
    for t in range(B):
        inp = conv[t].reshape(S, 1)
        for l in range(n_layers):
            gates = inp @ params[f"w_ih_{l}"] + h[l] @ params[f"w_hh_{l}"] + params[f"b_{l}"]
            i_g = jax.nn.sigmoid(gates[:, :H])
            f_g = jax.nn.sigmoid(gates[:, H:2 * H])
            g_g = jnp.tanh(gates[:, 2 * H:3 * H])
            o_g = jax.nn.sigmoid(gates[:, 3 * H:])
            c[l] = f_g * c[l] + i_g * g_g
            h[l] = o_g * jnp.tanh(c[l])
            inp = h[l]
        outs.append(h[-1])
    lstm_out = jnp.stack(outs, axis=0)                   # (B, S, H), torch-contiguous
    last = lstm_out.reshape(S, B, H)[-1]                 # .view(S, B, H)[-1]
    return last @ params["w_lin"] + params["lin_b"]


if __name__ == "__main__":
    n_features, n_hidden, seq_len, n_layers = 1, 32, 8, 2
    B = 8

    key = jax.random.PRNGKey(0)
    kx, kp = jax.random.split(key)
    sequences = jax.random.normal(kx, (B, seq_len, n_features), jnp.float32)
    params = init_params(kp, n_features, n_hidden, n_layers)

    y = covid_predictor_forward(sequences, params,
                                n_hidden=n_hidden, seq_len=seq_len, n_layers=n_layers)
    y = jax.block_until_ready(y)

    y_ref = reference_forward(sequences, params,
                              n_hidden=n_hidden, seq_len=seq_len, n_layers=n_layers)
    assert y.shape == (B, 1)
    np.testing.assert_allclose(np.asarray(y), np.asarray(y_ref), rtol=1e-4, atol=1e-4)
    print("KERNEL_OK")
</pallas_src>

<mosaic_0001>
module attributes {stable_mosaic.version = 11 : i64} {
  func.func @_covid_kernel(%arg0: memref<4xf32, #tpu.memory_space<smem>>, %arg1: memref<8x8xf32, #tpu.memory_space<vmem>>, %arg2: memref<8x1024xf32, #tpu.memory_space<vmem>>, %arg3: memref<1x1024xf32, #tpu.memory_space<vmem>>, %arg4: memref<32x128xf32, #tpu.memory_space<vmem>>, %arg5: memref<32x128xf32, #tpu.memory_space<vmem>>, %arg6: memref<32x128xf32, #tpu.memory_space<vmem>>, %arg7: memref<1x128xf32, #tpu.memory_space<vmem>>, %arg8: memref<1x32xf32, #tpu.memory_space<vmem>>, %arg9: memref<8x1xf32, #tpu.memory_space<vmem>>) attributes {dimension_semantics = [], scalar_prefetch = 0 : i64, scratch_operands = 0 : i64, tpu.core_type = #tpu.core_type<tc>} {
    %c0 = arith.constant 0 : index
    %0 = memref.load %arg0[%c0] : memref<4xf32, #tpu.memory_space<smem>>
    %c1 = arith.constant 1 : index
    %1 = memref.load %arg0[%c1] : memref<4xf32, #tpu.memory_space<smem>>
    %c2 = arith.constant 2 : index
    %2 = memref.load %arg0[%c2] : memref<4xf32, #tpu.memory_space<smem>>
    %c3 = arith.constant 3 : index
    %3 = memref.load %arg0[%c3] : memref<4xf32, #tpu.memory_space<smem>>
    %c0_0 = arith.constant 0 : index
    %c0_1 = arith.constant 0 : index
    %4 = vector.load %arg1[%c0_0, %c0_1] : memref<8x8xf32, #tpu.memory_space<vmem>>, vector<8x8xf32>
    %5 = vector.extract_strided_slice %4 {offsets = [0, 0], sizes = [7, 8], strides = [1, 1]} : vector<8x8xf32> to vector<7x8xf32>
    %6 = vector.broadcast %0 : f32 to vector<7x8xf32>
    %7 = arith.mulf %6, %5 : vector<7x8xf32>
    %8 = vector.extract_strided_slice %4 {offsets = [1, 0], sizes = [7, 8], strides = [1, 1]} : vector<8x8xf32> to vector<7x8xf32>
    %9 = vector.broadcast %1 : f32 to vector<7x8xf32>
    %10 = arith.mulf %9, %8 : vector<7x8xf32>
    %11 = arith.addf %7, %10 : vector<7x8xf32>
    %12 = vector.broadcast %2 : f32 to vector<7x8xf32>
    %13 = arith.addf %11, %12 : vector<7x8xf32>
    %c0_2 = arith.constant 0 : index
    %c0_3 = arith.constant 0 : index
    %14 = vector.load %arg2[%c0_2, %c0_3] : memref<8x1024xf32, #tpu.memory_space<vmem>>, vector<8x1024xf32>
    %cst = arith.constant dense<0.000000e+00> : vector<7x1024xf32>
    %15 = tpu.matmul %13, %14, %cst {dimension_numbers = #tpu.dot_dimension_numbers<[1], [0], [0], [1], [0, 0, 1, 1], [], []>} : vector<7x8xf32>, vector<8x1024xf32>, vector<7x1024xf32> -> vector<7x1024xf32>
    %c0_4 = arith.constant 0 : index
    %c0_5 = arith.constant 0 : index
    %16 = vector.load %arg3[%c0_4, %c0_5] : memref<1x1024xf32, #tpu.memory_space<vmem>>, vector<1x1024xf32>
    %17 = vector.broadcast %16 : vector<1x1024xf32> to vector<7x1024xf32>
    %18 = arith.addf %15, %17 : vector<7x1024xf32>
    %c0_6 = arith.constant 0 : index
    %c0_7 = arith.constant 0 : index
    %19 = vector.load %arg4[%c0_6, %c0_7] : memref<32x128xf32, #tpu.memory_space<vmem>>, vector<32x128xf32>
    %c0_8 = arith.constant 0 : index
    %c0_9 = arith.constant 0 : index
    %20 = vector.load %arg5[%c0_8, %c0_9] : memref<32x128xf32, #tpu.memory_space<vmem>>, vector<32x128xf32>
    %c0_10 = arith.constant 0 : index
    %c0_11 = arith.constant 0 : index
    %21 = vector.load %arg6[%c0_10, %c0_11] : memref<32x128xf32, #tpu.memory_space<vmem>>, vector<32x128xf32>
    %c0_12 = arith.constant 0 : index
    %c0_13 = arith.constant 0 : index
    %22 = vector.load %arg7[%c0_12, %c0_13] : memref<1x128xf32, #tpu.memory_space<vmem>>, vector<1x128xf32>
    %cst_14 = arith.constant 0.000000e+00 : f32
    %23 = vector.broadcast %cst_14 : f32 to vector<7x32xf32>
    %cst_15 = arith.constant 0.000000e+00 : f32
    %24 = vector.broadcast %cst_15 : f32 to vector<7x32xf32>
    %25 = vector.extract_strided_slice %18 {offsets = [0, 0], sizes = [7, 128], strides = [1, 1]} : vector<7x1024xf32> to vector<7x128xf32>
    %26 = arith.negf %25 : vector<7x128xf32>
    %27 = math.exp %26 : vector<7x128xf32>
    %cst_16 = arith.constant 1.000000e+00 : f32
    %28 = vector.broadcast %cst_16 : f32 to vector<7x128xf32>
    %29 = arith.addf %28, %27 : vector<7x128xf32>
    %30 = arith.divf %28, %29 : vector<7x128xf32>
    %31 = vector.extract_strided_slice %25 {offsets = [0, 64], sizes = [7, 32], strides = [1, 1]} : vector<7x128xf32> to vector<7x32xf32>
    %32 = math.tanh %31 : vector<7x32xf32>
    %33 = vector.extract_strided_slice %30 {offsets = [0, 0], sizes = [7, 32], strides = [1, 1]} : vector<7x128xf32> to vector<7x32xf32>
    %34 = vector.extract_strided_slice %30 {offsets = [0, 32], sizes = [7, 32], strides = [1, 1]} : vector<7x128xf32> to vector<7x32xf32>
    %35 = vector.extract_strided_slice %30 {offsets = [0, 96], sizes = [7, 32], strides = [1, 1]} : vector<7x128xf32> to vector<7x32xf32>
    %36 = arith.mulf %34, %23 : vector<7x32xf32>
    %37 = arith.mulf %33, %32 : vector<7x32xf32>
    %38 = arith.addf %36, %37 : vector<7x32xf32>
    %39 = math.tanh %38 : vector<7x32xf32>
    %40 = arith.mulf %35, %39 : vector<7x32xf32>
    %cst_17 = arith.constant dense<0.000000e+00> : vector<7x128xf32>
    %41 = tpu.matmul %40, %21, %cst_17 {dimension_numbers = #tpu.dot_dimension_numbers<[1], [0], [0], [1], [0, 0, 1, 1], [], []>} : vector<7x32xf32>, vector<32x128xf32>, vector<7x128xf32> -> vector<7x128xf32>
    %42 = vector.broadcast %22 : vector<1x128xf32> to vector<7x128xf32>
    %43 = arith.addf %41, %42 : vector<7x128xf32>
    %44 = arith.negf %43 : vector<7x128xf32>
    %45 = math.exp %44 : vector<7x128xf32>
    %cst_18 = arith.constant 1.000000e+00 : f32
    %46 = vector.broadcast %cst_18 : f32 to vector<7x128xf32>
    %47 = arith.addf %46, %45 : vector<7x128xf32>
    %48 = arith.divf %46, %47 : vector<7x128xf32>
    %49 = vector.extract_strided_slice %43 {offsets = [0, 64], sizes = [7, 32], strides = [1, 1]} : vector<7x128xf32> to vector<7x32xf32>
    %50 = math.tanh %49 : vector<7x32xf32>
    %51 = vector.extract_strided_slice %48 {offsets = [0, 0], sizes = [7, 32], strides = [1, 1]} : vector<7x128xf32> to vector<7x32xf32>
    %52 = vector.extract_strided_slice %48 {offsets = [0, 32], sizes = [7, 32], strides = [1, 1]} : vector<7x128xf32> to vector<7x32xf32>
    %53 = vector.extract_strided_slice %48 {offsets = [0, 96], sizes = [7, 32], strides = [1, 1]} : vector<7x128xf32> to vector<7x32xf32>
    %54 = arith.mulf %52, %24 : vector<7x32xf32>
    %55 = arith.mulf %51, %50 : vector<7x32xf32>
    %56 = arith.addf %54, %55 : vector<7x32xf32>
    %57 = math.tanh %56 : vector<7x32xf32>
    %58 = arith.mulf %53, %57 : vector<7x32xf32>
    %cst_19 = arith.constant dense<0.000000e+00> : vector<7x128xf32>
    %59 = tpu.matmul %40, %19, %cst_19 {dimension_numbers = #tpu.dot_dimension_numbers<[1], [0], [0], [1], [0, 0, 1, 1], [], []>} : vector<7x32xf32>, vector<32x128xf32>, vector<7x128xf32> -> vector<7x128xf32>
    %cst_20 = arith.constant dense<0.000000e+00> : vector<7x128xf32>
    %60 = tpu.matmul %58, %20, %cst_20 {dimension_numbers = #tpu.dot_dimension_numbers<[1], [0], [0], [1], [0, 0, 1, 1], [], []>} : vector<7x32xf32>, vector<32x128xf32>, vector<7x128xf32> -> vector<7x128xf32>
    %61 = vector.extract_strided_slice %18 {offsets = [0, 128], sizes = [7, 128], strides = [1, 1]} : vector<7x1024xf32> to vector<7x128xf32>
    %62 = arith.addf %61, %59 : vector<7x128xf32>
    %63 = arith.negf %62 : vector<7x128xf32>
    %64 = math.exp %63 : vector<7x128xf32>
    %cst_21 = arith.constant 1.000000e+00 : f32
    %65 = vector.broadcast %cst_21 : f32 to vector<7x128xf32>
    %66 = arith.addf %65, %64 : vector<7x128xf32>
    %67 = arith.divf %65, %66 : vector<7x128xf32>
    %68 = vector.extract_strided_slice %62 {offsets = [0, 64], sizes = [7, 32], strides = [1, 1]} : vector<7x128xf32> to vector<7x32xf32>
    %69 = math.tanh %68 : vector<7x32xf32>
    %70 = vector.extract_strided_slice %67 {offsets = [0, 0], sizes = [7, 32], strides = [1, 1]} : vector<7x128xf32> to vector<7x32xf32>
    %71 = vector.extract_strided_slice %67 {offsets = [0, 32], sizes = [7, 32], strides = [1, 1]} : vector<7x128xf32> to vector<7x32xf32>
    %72 = vector.extract_strided_slice %67 {offsets = [0, 96], sizes = [7, 32], strides = [1, 1]} : vector<7x128xf32> to vector<7x32xf32>
    %73 = arith.mulf %71, %38 : vector<7x32xf32>
    %74 = arith.mulf %70, %69 : vector<7x32xf32>
    %75 = arith.addf %73, %74 : vector<7x32xf32>
    %76 = math.tanh %75 : vector<7x32xf32>
    %77 = arith.mulf %72, %76 : vector<7x32xf32>
    %cst_22 = arith.constant dense<0.000000e+00> : vector<7x128xf32>
    %78 = tpu.matmul %77, %21, %cst_22 {dimension_numbers = #tpu.dot_dimension_numbers<[1], [0], [0], [1], [0, 0, 1, 1], [], []>} : vector<7x32xf32>, vector<32x128xf32>, vector<7x128xf32> -> vector<7x128xf32>
    %79 = vector.broadcast %22 : vector<1x128xf32> to vector<7x128xf32>
    %80 = arith.addf %78, %79 : vector<7x128xf32>
    %81 = arith.addf %80, %60 : vector<7x128xf32>
    %82 = arith.negf %81 : vector<7x128xf32>
    %83 = math.exp %82 : vector<7x128xf32>
    %cst_23 = arith.constant 1.000000e+00 : f32
    %84 = vector.broadcast %cst_23 : f32 to vector<7x128xf32>
    %85 = arith.addf %84, %83 : vector<7x128xf32>
    %86 = arith.divf %84, %85 : vector<7x128xf32>
    %87 = vector.extract_strided_slice %81 {offsets = [0, 64], sizes = [7, 32], strides = [1, 1]} : vector<7x128xf32> to vector<7x32xf32>
    %88 = math.tanh %87 : vector<7x32xf32>
    %89 = vector.extract_strided_slice %86 {offsets = [0, 0], sizes = [7, 32], strides = [1, 1]} : vector<7x128xf32> to vector<7x32xf32>
    %90 = vector.extract_strided_slice %86 {offsets = [0, 32], sizes = [7, 32], strides = [1, 1]} : vector<7x128xf32> to vector<7x32xf32>
    %91 = vector.extract_strided_slice %86 {offsets = [0, 96], sizes = [7, 32], strides = [1, 1]} : vector<7x128xf32> to vector<7x32xf32>
    %92 = arith.mulf %90, %56 : vector<7x32xf32>
    %93 = arith.mulf %89, %88 : vector<7x32xf32>
    %94 = arith.addf %92, %93 : vector<7x32xf32>
    %95 = math.tanh %94 : vector<7x32xf32>
    %96 = arith.mulf %91, %95 : vector<7x32xf32>
    %cst_24 = arith.constant dense<0.000000e+00> : vector<7x128xf32>
    %97 = tpu.matmul %77, %19, %cst_24 {dimension_numbers = #tpu.dot_dimension_numbers<[1], [0], [0], [1], [0, 0, 1, 1], [], []>} : vector<7x32xf32>, vector<32x128xf32>, vector<7x128xf32> -> vector<7x128xf32>
    %cst_25 = arith.constant dense<0.000000e+00> : vector<7x128xf32>
    %98 = tpu.matmul %96, %20, %cst_25 {dimension_numbers = #tpu.dot_dimension_numbers<[1], [0], [0], [1], [0, 0, 1, 1], [], []>} : vector<7x32xf32>, vector<32x128xf32>, vector<7x128xf32> -> vector<7x128xf32>
    %99 = vector.extract_strided_slice %18 {offsets = [0, 256], sizes = [7, 128], strides = [1, 1]} : vector<7x1024xf32> to vector<7x128xf32>
    %100 = arith.addf %99, %97 : vector<7x128xf32>
    %101 = arith.negf %100 : vector<7x128xf32>
    %102 = math.exp %101 : vector<7x128xf32>
    %cst_26 = arith.constant 1.000000e+00 : f32
    %103 = vector.broadcast %cst_26 : f32 to vector<7x128xf32>
    %104 = arith.addf %103, %102 : vector<7x128xf32>
    %105 = arith.divf %103, %104 : vector<7x128xf32>
    %106 = vector.extract_strided_slice %100 {offsets = [0, 64], sizes = [7, 32], strides = [1, 1]} : vector<7x128xf32> to vector<7x32xf32>
    %107 = math.tanh %106 : vector<7x32xf32>
    %108 = vector.extract_strided_slice %105 {offsets = [0, 0], sizes = [7, 32], strides = [1, 1]} : vector<7x128xf32> to vector<7x32xf32>
    %109 = vector.extract_strided_slice %105 {offsets = [0, 32], sizes = [7, 32], strides = [1, 1]} : vector<7x128xf32> to vector<7x32xf32>
    %110 = vector.extract_strided_slice %105 {offsets = [0, 96], sizes = [7, 32], strides = [1, 1]} : vector<7x128xf32> to vector<7x32xf32>
    %111 = arith.mulf %109, %75 : vector<7x32xf32>
    %112 = arith.mulf %108, %107 : vector<7x32xf32>
    %113 = arith.addf %111, %112 : vector<7x32xf32>
    %114 = math.tanh %113 : vector<7x32xf32>
    %115 = arith.mulf %110, %114 : vector<7x32xf32>
    %cst_27 = arith.constant dense<0.000000e+00> : vector<7x128xf32>
    %116 = tpu.matmul %115, %21, %cst_27 {dimension_numbers = #tpu.dot_dimension_numbers<[1], [0], [0], [1], [0, 0, 1, 1], [], []>} : vector<7x32xf32>, vector<32x128xf32>, vector<7x128xf32> -> vector<7x128xf32>
    %117 = vector.broadcast %22 : vector<1x128xf32> to vector<7x128xf32>
    %118 = arith.addf %116, %117 : vector<7x128xf32>
    %119 = arith.addf %118, %98 : vector<7x128xf32>
    %120 = arith.negf %119 : vector<7x128xf32>
    %121 = math.exp %120 : vector<7x128xf32>
    %cst_28 = arith.constant 1.000000e+00 : f32
    %122 = vector.broadcast %cst_28 : f32 to vector<7x128xf32>
    %123 = arith.addf %122, %121 : vector<7x128xf32>
    %124 = arith.divf %122, %123 : vector<7x128xf32>
    %125 = vector.extract_strided_slice %119 {offsets = [0, 64], sizes = [7, 32], strides = [1, 1]} : vector<7x128xf32> to vector<7x32xf32>
    %126 = math.tanh %125 : vector<7x32xf32>
    %127 = vector.extract_strided_slice %124 {offsets = [0, 0], sizes = [7, 32], strides = [1, 1]} : vector<7x128xf32> to vector<7x32xf32>
    %128 = vector.extract_strided_slice %124 {offsets = [0, 32], sizes = [7, 32], strides = [1, 1]} : vector<7x128xf32> to vector<7x32xf32>
    %129 = vector.extract_strided_slice %124 {offsets = [0, 96], sizes = [7, 32], strides = [1, 1]} : vector<7x128xf32> to vector<7x32xf32>
    %130 = arith.mulf %128, %94 : vector<7x32xf32>
    %131 = arith.mulf %127, %126 : vector<7x32xf32>
    %132 = arith.addf %130, %131 : vector<7x32xf32>
    %133 = math.tanh %132 : vector<7x32xf32>
    %134 = arith.mulf %129, %133 : vector<7x32xf32>
    %cst_29 = arith.constant dense<0.000000e+00> : vector<7x128xf32>
    %135 = tpu.matmul %115, %19, %cst_29 {dimension_numbers = #tpu.dot_dimension_numbers<[1], [0], [0], [1], [0, 0, 1, 1], [], []>} : vector<7x32xf32>, vector<32x128xf32>, vector<7x128xf32> -> vector<7x128xf32>
    %cst_30 = arith.constant dense<0.000000e+00> : vector<7x128xf32>
    %136 = tpu.matmul %134, %20, %cst_30 {dimension_numbers = #tpu.dot_dimension_numbers<[1], [0], [0], [1], [0, 0, 1, 1], [], []>} : vector<7x32xf32>, vector<32x128xf32>, vector<7x128xf32> -> vector<7x128xf32>
    %137 = vector.extract_strided_slice %18 {offsets = [0, 384], sizes = [7, 128], strides = [1, 1]} : vector<7x1024xf32> to vector<7x128xf32>
    %138 = arith.addf %137, %135 : vector<7x128xf32>
    %139 = arith.negf %138 : vector<7x128xf32>
    %140 = math.exp %139 : vector<7x128xf32>
    %cst_31 = arith.constant 1.000000e+00 : f32
    %141 = vector.broadcast %cst_31 : f32 to vector<7x128xf32>
    %142 = arith.addf %141, %140 : vector<7x128xf32>
    %143 = arith.divf %141, %142 : vector<7x128xf32>
    %144 = vector.extract_strided_slice %138 {offsets = [0, 64], sizes = [7, 32], strides = [1, 1]} : vector<7x128xf32> to vector<7x32xf32>
    %145 = math.tanh %144 : vector<7x32xf32>
    %146 = vector.extract_strided_slice %143 {offsets = [0, 0], sizes = [7, 32], strides = [1, 1]} : vector<7x128xf32> to vector<7x32xf32>
    %147 = vector.extract_strided_slice %143 {offsets = [0, 32], sizes = [7, 32], strides = [1, 1]} : vector<7x128xf32> to vector<7x32xf32>
    %148 = vector.extract_strided_slice %143 {offsets = [0, 96], sizes = [7, 32], strides = [1, 1]} : vector<7x128xf32> to vector<7x32xf32>
    %149 = arith.mulf %147, %113 : vector<7x32xf32>
    %150 = arith.mulf %146, %145 : vector<7x32xf32>
    %151 = arith.addf %149, %150 : vector<7x32xf32>
    %152 = math.tanh %151 : vector<7x32xf32>
    %153 = arith.mulf %148, %152 : vector<7x32xf32>
    %cst_32 = arith.constant dense<0.000000e+00> : vector<7x128xf32>
    %154 = tpu.matmul %153, %21, %cst_32 {dimension_numbers = #tpu.dot_dimension_numbers<[1], [0], [0], [1], [0, 0, 1, 1], [], []>} : vector<7x32xf32>, vector<32x128xf32>, vector<7x128xf32> -> vector<7x128xf32>
    %155 = vector.broadcast %22 : vector<1x128xf32> to vector<7x128xf32>
    %156 = arith.addf %154, %155 : vector<7x128xf32>
    %157 = arith.addf %156, %136 : vector<7x128xf32>
    %158 = arith.negf %157 : vector<7x128xf32>
    %159 = math.exp %158 : vector<7x128xf32>
    %cst_33 = arith.constant 1.000000e+00 : f32
    %160 = vector.broadcast %cst_33 : f32 to vector<7x128xf32>
    %161 = arith.addf %160, %159 : vector<7x128xf32>
    %162 = arith.divf %160, %161 : vector<7x128xf32>
    %163 = vector.extract_strided_slice %157 {offsets = [0, 64], sizes = [7, 32], strides = [1, 1]} : vector<7x128xf32> to vector<7x32xf32>
    %164 = math.tanh %163 : vector<7x32xf32>
    %165 = vector.extract_strided_slice %162 {offsets = [0, 0], sizes = [7, 32], strides = [1, 1]} : vector<7x128xf32> to vector<7x32xf32>
    %166 = vector.extract_strided_slice %162 {offsets = [0, 32], sizes = [7, 32], strides = [1, 1]} : vector<7x128xf32> to vector<7x32xf32>
    %167 = vector.extract_strided_slice %162 {offsets = [0, 96], sizes = [7, 32], strides = [1, 1]} : vector<7x128xf32> to vector<7x32xf32>
    %168 = arith.mulf %166, %132 : vector<7x32xf32>
    %169 = arith.mulf %165, %164 : vector<7x32xf32>
    %170 = arith.addf %168, %169 : vector<7x32xf32>
    %171 = math.tanh %170 : vector<7x32xf32>
    %172 = arith.mulf %167, %171 : vector<7x32xf32>
    %cst_34 = arith.constant dense<0.000000e+00> : vector<7x128xf32>
    %173 = tpu.matmul %153, %19, %cst_34 {dimension_numbers = #tpu.dot_dimension_numbers<[1], [0], [0], [1], [0, 0, 1, 1], [], []>} : vector<7x32xf32>, vector<32x128xf32>, vector<7x128xf32> -> vector<7x128xf32>
    %cst_35 = arith.constant dense<0.000000e+00> : vector<7x128xf32>
    %174 = tpu.matmul %172, %20, %cst_35 {dimension_numbers = #tpu.dot_dimension_numbers<[1], [0], [0], [1], [0, 0, 1, 1], [], []>} : vector<7x32xf32>, vector<32x128xf32>, vector<7x128xf32> -> vector<7x128xf32>
    %175 = vector.extract_strided_slice %18 {offsets = [0, 512], sizes = [7, 128], strides = [1, 1]} : vector<7x1024xf32> to vector<7x128xf32>
    %176 = arith.addf %175, %173 : vector<7x128xf32>
    %177 = arith.negf %176 : vector<7x128xf32>
    %178 = math.exp %177 : vector<7x128xf32>
    %cst_36 = arith.constant 1.000000e+00 : f32
    %179 = vector.broadcast %cst_36 : f32 to vector<7x128xf32>
    %180 = arith.addf %179, %178 : vector<7x128xf32>
    %181 = arith.divf %179, %180 : vector<7x128xf32>
    %182 = vector.extract_strided_slice %176 {offsets = [0, 64], sizes = [7, 32], strides = [1, 1]} : vector<7x128xf32> to vector<7x32xf32>
    %183 = math.tanh %182 : vector<7x32xf32>
    %184 = vector.extract_strided_slice %181 {offsets = [0, 0], sizes = [7, 32], strides = [1, 1]} : vector<7x128xf32> to vector<7x32xf32>
    %185 = vector.extract_strided_slice %181 {offsets = [0, 32], sizes = [7, 32], strides = [1, 1]} : vector<7x128xf32> to vector<7x32xf32>
    %186 = vector.extract_strided_slice %181 {offsets = [0, 96], sizes = [7, 32], strides = [1, 1]} : vector<7x128xf32> to vector<7x32xf32>
    %187 = arith.mulf %185, %151 : vector<7x32xf32>
    %188 = arith.mulf %184, %183 : vector<7x32xf32>
    %189 = arith.addf %187, %188 : vector<7x32xf32>
    %190 = math.tanh %189 : vector<7x32xf32>
    %191 = arith.mulf %186, %190 : vector<7x32xf32>
    %cst_37 = arith.constant dense<0.000000e+00> : vector<7x128xf32>
    %192 = tpu.matmul %191, %21, %cst_37 {dimension_numbers = #tpu.dot_dimension_numbers<[1], [0], [0], [1], [0, 0, 1, 1], [], []>} : vector<7x32xf32>, vector<32x128xf32>, vector<7x128xf32> -> vector<7x128xf32>
    %193 = vector.broadcast %22 : vector<1x128xf32> to vector<7x128xf32>
    %194 = arith.addf %192, %193 : vector<7x128xf32>
    %195 = arith.addf %194, %174 : vector<7x128xf32>
    %196 = arith.negf %195 : vector<7x128xf32>
    %197 = math.exp %196 : vector<7x128xf32>
    %cst_38 = arith.constant 1.000000e+00 : f32
    %198 = vector.broadcast %cst_38 : f32 to vector<7x128xf32>
    %199 = arith.addf %198, %197 : vector<7x128xf32>
    %200 = arith.divf %198, %199 : vector<7x128xf32>
    %201 = vector.extract_strided_slice %195 {offsets = [0, 64], sizes = [7, 32], strides = [1, 1]} : vector<7x128xf32> to vector<7x32xf32>
    %202 = math.tanh %201 : vector<7x32xf32>
    %203 = vector.extract_strided_slice %200 {offsets = [0, 0], sizes = [7, 32], strides = [1, 1]} : vector<7x128xf32> to vector<7x32xf32>
    %204 = vector.extract_strided_slice %200 {offsets = [0, 32], sizes = [7, 32], strides = [1, 1]} : vector<7x128xf32> to vector<7x32xf32>
    %205 = vector.extract_strided_slice %200 {offsets = [0, 96], sizes = [7, 32], strides = [1, 1]} : vector<7x128xf32> to vector<7x32xf32>
    %206 = arith.mulf %204, %170 : vector<7x32xf32>
    %207 = arith.mulf %203, %202 : vector<7x32xf32>
    %208 = arith.addf %206, %207 : vector<7x32xf32>
    %209 = math.tanh %208 : vector<7x32xf32>
    %210 = arith.mulf %205, %209 : vector<7x32xf32>
    %cst_39 = arith.constant dense<0.000000e+00> : vector<7x128xf32>
    %211 = tpu.matmul %191, %19, %cst_39 {dimension_numbers = #tpu.dot_dimension_numbers<[1], [0], [0], [1], [0, 0, 1, 1], [], []>} : vector<7x32xf32>, vector<32x128xf32>, vector<7x128xf32> -> vector<7x128xf32>
    %cst_40 = arith.constant dense<0.000000e+00> : vector<7x128xf32>
    %212 = tpu.matmul %210, %20, %cst_40 {dimension_numbers = #tpu.dot_dimension_numbers<[1], [0], [0], [1], [0, 0, 1, 1], [], []>} : vector<7x32xf32>, vector<32x128xf32>, vector<7x128xf32> -> vector<7x128xf32>
    %213 = vector.extract_strided_slice %18 {offsets = [0, 640], sizes = [7, 128], strides = [1, 1]} : vector<7x1024xf32> to vector<7x128xf32>
    %214 = arith.addf %213, %211 : vector<7x128xf32>
    %215 = arith.negf %214 : vector<7x128xf32>
    %216 = math.exp %215 : vector<7x128xf32>
    %cst_41 = arith.constant 1.000000e+00 : f32
    %217 = vector.broadcast %cst_41 : f32 to vector<7x128xf32>
    %218 = arith.addf %217, %216 : vector<7x128xf32>
    %219 = arith.divf %217, %218 : vector<7x128xf32>
    %220 = vector.extract_strided_slice %214 {offsets = [0, 64], sizes = [7, 32], strides = [1, 1]} : vector<7x128xf32> to vector<7x32xf32>
    %221 = math.tanh %220 : vector<7x32xf32>
    %222 = vector.extract_strided_slice %219 {offsets = [0, 0], sizes = [7, 32], strides = [1, 1]} : vector<7x128xf32> to vector<7x32xf32>
    %223 = vector.extract_strided_slice %219 {offsets = [0, 32], sizes = [7, 32], strides = [1, 1]} : vector<7x128xf32> to vector<7x32xf32>
    %224 = vector.extract_strided_slice %219 {offsets = [0, 96], sizes = [7, 32], strides = [1, 1]} : vector<7x128xf32> to vector<7x32xf32>
    %225 = arith.mulf %223, %189 : vector<7x32xf32>
    %226 = arith.mulf %222, %221 : vector<7x32xf32>
    %227 = arith.addf %225, %226 : vector<7x32xf32>
    %228 = math.tanh %227 : vector<7x32xf32>
    %229 = arith.mulf %224, %228 : vector<7x32xf32>
    %cst_42 = arith.constant dense<0.000000e+00> : vector<7x128xf32>
    %230 = tpu.matmul %229, %21, %cst_42 {dimension_numbers = #tpu.dot_dimension_numbers<[1], [0], [0], [1], [0, 0, 1, 1], [], []>} : vector<7x32xf32>, vector<32x128xf32>, vector<7x128xf32> -> vector<7x128xf32>
    %231 = vector.broadcast %22 : vector<1x128xf32> to vector<7x128xf32>
    %232 = arith.addf %230, %231 : vector<7x128xf32>
    %233 = arith.addf %232, %212 : vector<7x128xf32>
    %234 = arith.negf %233 : vector<7x128xf32>
    %235 = math.exp %234 : vector<7x128xf32>
    %cst_43 = arith.constant 1.000000e+00 : f32
    %236 = vector.broadcast %cst_43 : f32 to vector<7x128xf32>
    %237 = arith.addf %236, %235 : vector<7x128xf32>
    %238 = arith.divf %236, %237 : vector<7x128xf32>
    %239 = vector.extract_strided_slice %233 {offsets = [0, 64], sizes = [7, 32], strides = [1, 1]} : vector<7x128xf32> to vector<7x32xf32>
    %240 = math.tanh %239 : vector<7x32xf32>
    %241 = vector.extract_strided_slice %238 {offsets = [0, 0], sizes = [7, 32], strides = [1, 1]} : vector<7x128xf32> to vector<7x32xf32>
    %242 = vector.extract_strided_slice %238 {offsets = [0, 32], sizes = [7, 32], strides = [1, 1]} : vector<7x128xf32> to vector<7x32xf32>
    %243 = vector.extract_strided_slice %238 {offsets = [0, 96], sizes = [7, 32], strides = [1, 1]} : vector<7x128xf32> to vector<7x32xf32>
    %244 = arith.mulf %242, %208 : vector<7x32xf32>
    %245 = arith.mulf %241, %240 : vector<7x32xf32>
    %246 = arith.addf %244, %245 : vector<7x32xf32>
    %247 = math.tanh %246 : vector<7x32xf32>
    %248 = arith.mulf %243, %247 : vector<7x32xf32>
    %cst_44 = arith.constant dense<0.000000e+00> : vector<7x128xf32>
    %249 = tpu.matmul %229, %19, %cst_44 {dimension_numbers = #tpu.dot_dimension_numbers<[1], [0], [0], [1], [0, 0, 1, 1], [], []>} : vector<7x32xf32>, vector<32x128xf32>, vector<7x128xf32> -> vector<7x128xf32>
    %cst_45 = arith.constant dense<0.000000e+00> : vector<7x128xf32>
    %250 = tpu.matmul %248, %20, %cst_45 {dimension_numbers = #tpu.dot_dimension_numbers<[1], [0], [0], [1], [0, 0, 1, 1], [], []>} : vector<7x32xf32>, vector<32x128xf32>, vector<7x128xf32> -> vector<7x128xf32>
    %251 = vector.extract_strided_slice %18 {offsets = [0, 768], sizes = [7, 128], strides = [1, 1]} : vector<7x1024xf32> to vector<7x128xf32>
    %252 = arith.addf %251, %249 : vector<7x128xf32>
    %253 = arith.negf %252 : vector<7x128xf32>
    %254 = math.exp %253 : vector<7x128xf32>
    %cst_46 = arith.constant 1.000000e+00 : f32
    %255 = vector.broadcast %cst_46 : f32 to vector<7x128xf32>
    %256 = arith.addf %255, %254 : vector<7x128xf32>
    %257 = arith.divf %255, %256 : vector<7x128xf32>
    %258 = vector.extract_strided_slice %252 {offsets = [0, 64], sizes = [7, 32], strides = [1, 1]} : vector<7x128xf32> to vector<7x32xf32>
    %259 = math.tanh %258 : vector<7x32xf32>
    %260 = vector.extract_strided_slice %257 {offsets = [0, 0], sizes = [7, 32], strides = [1, 1]} : vector<7x128xf32> to vector<7x32xf32>
    %261 = vector.extract_strided_slice %257 {offsets = [0, 32], sizes = [7, 32], strides = [1, 1]} : vector<7x128xf32> to vector<7x32xf32>
    %262 = vector.extract_strided_slice %257 {offsets = [0, 96], sizes = [7, 32], strides = [1, 1]} : vector<7x128xf32> to vector<7x32xf32>
    %263 = arith.mulf %261, %227 : vector<7x32xf32>
    %264 = arith.mulf %260, %259 : vector<7x32xf32>
    %265 = arith.addf %263, %264 : vector<7x32xf32>
    %266 = math.tanh %265 : vector<7x32xf32>
    %267 = arith.mulf %262, %266 : vector<7x32xf32>
    %cst_47 = arith.constant dense<0.000000e+00> : vector<7x128xf32>
    %268 = tpu.matmul %267, %21, %cst_47 {dimension_numbers = #tpu.dot_dimension_numbers<[1], [0], [0], [1], [0, 0, 1, 1], [], []>} : vector<7x32xf32>, vector<32x128xf32>, vector<7x128xf32> -> vector<7x128xf32>
    %269 = vector.broadcast %22 : vector<1x128xf32> to vector<7x128xf32>
    %270 = arith.addf %268, %269 : vector<7x128xf32>
    %271 = arith.addf %270, %250 : vector<7x128xf32>
    %272 = arith.negf %271 : vector<7x128xf32>
    %273 = math.exp %272 : vector<7x128xf32>
    %cst_48 = arith.constant 1.000000e+00 : f32
    %274 = vector.broadcast %cst_48 : f32 to vector<7x128xf32>
    %275 = arith.addf %274, %273 : vector<7x128xf32>
    %276 = arith.divf %274, %275 : vector<7x128xf32>
    %277 = vector.extract_strided_slice %271 {offsets = [0, 64], sizes = [7, 32], strides = [1, 1]} : vector<7x128xf32> to vector<7x32xf32>
    %278 = math.tanh %277 : vector<7x32xf32>
    %279 = vector.extract_strided_slice %276 {offsets = [0, 0], sizes = [7, 32], strides = [1, 1]} : vector<7x128xf32> to vector<7x32xf32>
    %280 = vector.extract_strided_slice %276 {offsets = [0, 32], sizes = [7, 32], strides = [1, 1]} : vector<7x128xf32> to vector<7x32xf32>
    %281 = vector.extract_strided_slice %276 {offsets = [0, 96], sizes = [7, 32], strides = [1, 1]} : vector<7x128xf32> to vector<7x32xf32>
    %282 = arith.mulf %280, %246 : vector<7x32xf32>
    %283 = arith.mulf %279, %278 : vector<7x32xf32>
    %284 = arith.addf %282, %283 : vector<7x32xf32>
    %285 = math.tanh %284 : vector<7x32xf32>
    %286 = arith.mulf %281, %285 : vector<7x32xf32>
    %cst_49 = arith.constant dense<0.000000e+00> : vector<7x128xf32>
    %287 = tpu.matmul %267, %19, %cst_49 {dimension_numbers = #tpu.dot_dimension_numbers<[1], [0], [0], [1], [0, 0, 1, 1], [], []>} : vector<7x32xf32>, vector<32x128xf32>, vector<7x128xf32> -> vector<7x128xf32>
    %cst_50 = arith.constant dense<0.000000e+00> : vector<7x128xf32>
    %288 = tpu.matmul %286, %20, %cst_50 {dimension_numbers = #tpu.dot_dimension_numbers<[1], [0], [0], [1], [0, 0, 1, 1], [], []>} : vector<7x32xf32>, vector<32x128xf32>, vector<7x128xf32> -> vector<7x128xf32>
    %289 = vector.extract_strided_slice %18 {offsets = [0, 896], sizes = [7, 128], strides = [1, 1]} : vector<7x1024xf32> to vector<7x128xf32>
    %290 = arith.addf %289, %287 : vector<7x128xf32>
    %291 = arith.negf %290 : vector<7x128xf32>
    %292 = math.exp %291 : vector<7x128xf32>
    %cst_51 = arith.constant 1.000000e+00 : f32
    %293 = vector.broadcast %cst_51 : f32 to vector<7x128xf32>
    %294 = arith.addf %293, %292 : vector<7x128xf32>
    %295 = arith.divf %293, %294 : vector<7x128xf32>
    %296 = vector.extract_strided_slice %290 {offsets = [0, 64], sizes = [7, 32], strides = [1, 1]} : vector<7x128xf32> to vector<7x32xf32>
    %297 = math.tanh %296 : vector<7x32xf32>
    %298 = vector.extract_strided_slice %295 {offsets = [0, 0], sizes = [7, 32], strides = [1, 1]} : vector<7x128xf32> to vector<7x32xf32>
    %299 = vector.extract_strided_slice %295 {offsets = [0, 32], sizes = [7, 32], strides = [1, 1]} : vector<7x128xf32> to vector<7x32xf32>
    %300 = vector.extract_strided_slice %295 {offsets = [0, 96], sizes = [7, 32], strides = [1, 1]} : vector<7x128xf32> to vector<7x32xf32>
    %301 = arith.mulf %299, %265 : vector<7x32xf32>
    %302 = arith.mulf %298, %297 : vector<7x32xf32>
    %303 = arith.addf %301, %302 : vector<7x32xf32>
    %304 = math.tanh %303 : vector<7x32xf32>
    %305 = arith.mulf %300, %304 : vector<7x32xf32>
    %cst_52 = arith.constant dense<0.000000e+00> : vector<7x128xf32>
    %306 = tpu.matmul %305, %21, %cst_52 {dimension_numbers = #tpu.dot_dimension_numbers<[1], [0], [0], [1], [0, 0, 1, 1], [], []>} : vector<7x32xf32>, vector<32x128xf32>, vector<7x128xf32> -> vector<7x128xf32>
    %307 = vector.broadcast %22 : vector<1x128xf32> to vector<7x128xf32>
    %308 = arith.addf %306, %307 : vector<7x128xf32>
    %309 = arith.addf %308, %288 : vector<7x128xf32>
    %310 = arith.negf %309 : vector<7x128xf32>
    %311 = math.exp %310 : vector<7x128xf32>
    %cst_53 = arith.constant 1.000000e+00 : f32
    %312 = vector.broadcast %cst_53 : f32 to vector<7x128xf32>
    %313 = arith.addf %312, %311 : vector<7x128xf32>
    %314 = arith.divf %312, %313 : vector<7x128xf32>
    %315 = vector.extract_strided_slice %309 {offsets = [0, 64], sizes = [7, 32], strides = [1, 1]} : vector<7x128xf32> to vector<7x32xf32>
    %316 = math.tanh %315 : vector<7x32xf32>
    %317 = vector.extract_strided_slice %314 {offsets = [0, 0], sizes = [7, 32], strides = [1, 1]} : vector<7x128xf32> to vector<7x32xf32>
    %318 = vector.extract_strided_slice %314 {offsets = [0, 32], sizes = [7, 32], strides = [1, 1]} : vector<7x128xf32> to vector<7x32xf32>
    %319 = vector.extract_strided_slice %314 {offsets = [0, 96], sizes = [7, 32], strides = [1, 1]} : vector<7x128xf32> to vector<7x32xf32>
    %320 = arith.mulf %318, %284 : vector<7x32xf32>
    %321 = arith.mulf %317, %316 : vector<7x32xf32>
    %322 = arith.addf %320, %321 : vector<7x32xf32>
    %323 = math.tanh %322 : vector<7x32xf32>
    %324 = arith.mulf %319, %323 : vector<7x32xf32>
    %325 = vector.extract_strided_slice %286 {offsets = [6, 0], sizes = [1, 32], strides = [1, 1]} : vector<7x32xf32> to vector<1x32xf32>
    %326 = tpu.concatenate %325, %324 in 0 : vector<1x32xf32>, vector<7x32xf32> -> vector<8x32xf32>
    %c0_54 = arith.constant 0 : index
    %c0_55 = arith.constant 0 : index
    %327 = vector.load %arg8[%c0_54, %c0_55] : memref<1x32xf32, #tpu.memory_space<vmem>>, vector<1x32xf32>
    %328 = vector.broadcast %327 : vector<1x32xf32> to vector<8x32xf32>
    %329 = arith.mulf %326, %328 : vector<8x32xf32>
    %cst_56 = arith.constant dense<0.000000e+00> : vector<8xf32>
    %330 = vector.multi_reduction <add>, %329, %cst_56 [1] : vector<8x32xf32> to vector<8xf32>
    %331 = vector.shape_cast %330 : vector<8xf32> to vector<8x1xf32>
    %332 = vector.broadcast %3 : f32 to vector<8x1xf32>
    %333 = arith.addf %331, %332 : vector<8x1xf32>
    %c0_57 = arith.constant 0 : index
    %c0_58 = arith.constant 0 : index
    %334 = vector.load %arg9[%c0_57, %c0_58] : memref<8x1xf32, #tpu.memory_space<vmem>>, vector<8x1xf32>
    tpu.vector_store %arg9[%c0_57, %c0_58], %333 {strides = array<i32>} : memref<8x1xf32, #tpu.memory_space<vmem>>, vector<8x1xf32>,
    return
  }
}

</mosaic_0001>

<llo_original>
// kernel: tpu_custom_call.1
$region0: #{tpu_custom_call.1}
  #allocation0 [shape = 'u32[]', space=smem, size = 0x4, offset = 0x4, fixed_abs, tag = 'smem constant byte address 0x4 - core index']
  #allocation1 [shape = 'u32[144,128]{1,0:T(1,128)}', space=vmem, size = 0x12000, scoped, tag = 'internal scratch']
  %s0 = inlined_call_operand.hbm [shape: f32[4], index: 0, kind: input, shape index: {}]
  %s1 = inlined_call_operand.hbm [shape: f32[8,8], index: 1, kind: input, shape index: {}]
  %s2 = inlined_call_operand.hbm [shape: f32[8,1024], index: 2, kind: input, shape index: {}]
  %s3 = inlined_call_operand.vmem [shape: f32[1,1024], index: 3, kind: input, shape index: {}]
  %s4 = inlined_call_operand.hbm [shape: f32[32,128], index: 4, kind: input, shape index: {}]
  %s5 = inlined_call_operand.hbm [shape: f32[32,128], index: 5, kind: input, shape index: {}]
  %s6 = inlined_call_operand.hbm [shape: f32[32,128], index: 6, kind: input, shape index: {}]
  %s7 = inlined_call_operand.vmem [shape: f32[1,128], index: 7, kind: input, shape index: {}]
  %s8 = inlined_call_operand.vmem [shape: f32[1,32], index: 8, kind: input, shape index: {}]
  %s9 = inlined_call_operand.vmem [shape: f32[8,1], index: 9, kind: output, shape index: {}]
  %s10 = sld [smem:[#allocation0]]
  $region70: #{tpu_custom_call.1} parent=0
    _
  %s12 = ssub.s32 1, %s10
  %s13 = scalar_select 0, %s12, %s10
  $region1: #{tpu_custom_call.1} parent=0
    #allocation2 [shape = 'u8[512]{0}', space=smem, size = 0x200, scoped, tag = 'input window, operand 0, single buffered']
    #allocation3 [shape = 's32[1]{0}', space=sflag, size = 0x4, scoped, tag = 'scoped memory for tpu_custom_call.1']
    #allocation4 [shape = 's32[1]{0}', space=sflag, size = 0x4, scoped, tag = 'scoped memory for tpu_custom_call.1']
    #allocation5 [shape = 'u8[4096]{0}', space=vmem, size = 0x1000, scoped, tag = 'input window, operand 1, single buffered']
    #allocation6 [shape = 'u8[32768]{0}', space=vmem, size = 0x8000, scoped, tag = 'input window, operand 2, single buffered']
    #allocation7 [shape = 's32[1]{0}', space=sflag, size = 0x4, scoped, tag = 'scoped memory for tpu_custom_call.1']
    #allocation8 [shape = 'u8[16384]{0}', space=vmem, size = 0x4000, scoped, tag = 'input window, operand 4, single buffered']
    #allocation9 [shape = 'u8[16384]{0}', space=vmem, size = 0x4000, scoped, tag = 'input window, operand 5, single buffered']
    #allocation10 [shape = 's32[1]{0}', space=sflag, size = 0x4, scoped, tag = 'scoped memory for tpu_custom_call.1']
    #allocation11 [shape = 'u8[16384]{0}', space=vmem, size = 0x4000, scoped, tag = 'input window, operand 6, single buffered']
    %14 = vsyncpa [#allocation4], 0
    %15 = vsyncpa [#allocation3], 0
    %16 = vsyncpa [#allocation7], 0
    %17 = vsyncpa [#allocation10], 0
    // Predicated region
    $region2: #{tpu_custom_call.1} parent=1 // pred_check
      _
    $region3: #{tpu_custom_call.1} parent=1 // pred_check_branch
      %19 = sbr.rel (0) target = $region5
    $region4: #{tpu_custom_call.1} parent=1 // pred_region
      %s21 = ssub.s32 16, 16
      %22 = vsyncadd [#allocation4], %s21
      %25 = dma.hbm_to_smem %s0, 16, [#allocation2], [#allocation4]
    $region5: #{tpu_custom_call.1} parent=1 // pred_fallthru
      _
    // Predicated region
    $region6: #{tpu_custom_call.1} parent=1 // pred_check
      _
    $region7: #{tpu_custom_call.1} parent=1 // pred_check_branch
      %27 = sbr.rel (0) target = $region9
    $region8: #{tpu_custom_call.1} parent=1 // pred_region
      %s29 = ssub.s32 128, 128
      %30 = vsyncadd [#allocation3], %s29
      %s32 = sshll.u32 [#allocation5], 4
      %s33 = int_to_ptr.vmem [resolvable:$true] %s32
      %35 = dma.hbm_to_vmem [thread:$0]  %s1, 128, %s33, [#allocation3]
    $region9: #{tpu_custom_call.1} parent=1 // pred_fallthru
      _
    // Predicated region
    $region10: #{tpu_custom_call.1} parent=1 // pred_check
      _
    $region11: #{tpu_custom_call.1} parent=1 // pred_check_branch
      %37 = sbr.rel (0) target = $region13
    $region12: #{tpu_custom_call.1} parent=1 // pred_region
      %s39 = ssub.s32 1024, 1024
      %40 = vsyncadd [#allocation7], %s39
      %s42 = sshll.u32 [#allocation6], 4
      %s43 = int_to_ptr.vmem [resolvable:$true] %s42
      %45 = dma.hbm_to_vmem [thread:$0]  %s2, 1024, %s43, [#allocation7]
    $region13: #{tpu_custom_call.1} parent=1 // pred_fallthru
      _
    // Predicated region
    $region14: #{tpu_custom_call.1} parent=1 // pred_check
      _
    $region15: #{tpu_custom_call.1} parent=1 // pred_check_branch
      %47 = sbr.rel (0) target = $region17
    $region16: #{tpu_custom_call.1} parent=1 // pred_region
      _
    $region17: #{tpu_custom_call.1} parent=1 // pred_fallthru
      _
    // Predicated region
    $region18: #{tpu_custom_call.1} parent=1 // pred_check
      _
    $region19: #{tpu_custom_call.1} parent=1 // pred_check_branch
      %49 = sbr.rel (0) target = $region21
    $region20: #{tpu_custom_call.1} parent=1 // pred_region
      %s51 = ssub.s32 512, 512
      %52 = vsyncadd [#allocation7], %s51
      %s53 = sshll.u32 [#allocation8], 4
      %s54 = int_to_ptr.vmem [resolvable:$true] %s53
      %59 = dma.hbm_to_vmem [thread:$0]  %s4, 512, %s54, [#allocation7], 128, 128, 8
    $region21: #{tpu_custom_call.1} parent=1 // pred_fallthru
      _
    // Predicated region
    $region22: #{tpu_custom_call.1} parent=1 // pred_check
      _
    $region23: #{tpu_custom_call.1} parent=1 // pred_check_branch
      %61 = sbr.rel (0) target = $region25
    $region24: #{tpu_custom_call.1} parent=1 // pred_region
      %s63 = ssub.s32 512, 512
      %64 = vsyncadd [#allocation10], %s63
      %s65 = sshll.u32 [#allocation9], 4
      %s66 = int_to_ptr.vmem [resolvable:$true] %s65
      %71 = dma.hbm_to_vmem [thread:$0]  %s5, 512, %s66, [#allocation10], 128, 128, 8
    $region25: #{tpu_custom_call.1} parent=1 // pred_fallthru
      _
    // Predicated region
    $region26: #{tpu_custom_call.1} parent=1 // pred_check
      _
    $region27: #{tpu_custom_call.1} parent=1 // pred_check_branch
      %73 = sbr.rel (0) target = $region29
    $region28: #{tpu_custom_call.1} parent=1 // pred_region
      %s75 = ssub.s32 512, 512
      %76 = vsyncadd [#allocation10], %s75
      %s77 = sshll.u32 [#allocation11], 4
      %s78 = int_to_ptr.vmem [resolvable:$true] %s77
      %83 = dma.hbm_to_vmem [thread:$0]  %s6, 512, %s78, [#allocation10], 128, 128, 8
    $region29: #{tpu_custom_call.1} parent=1 // pred_fallthru
      _
    // Predicated region
    $region30: #{tpu_custom_call.1} parent=1 // pred_check
      _
    $region31: #{tpu_custom_call.1} parent=1 // pred_check_branch
      %85 = sbr.rel (0) target = $region33
    $region32: #{tpu_custom_call.1} parent=1 // pred_region
      _
    $region33: #{tpu_custom_call.1} parent=1 // pred_fallthru
      _
    // Predicated region
    $region34: #{tpu_custom_call.1} parent=1 // pred_check
      _
    $region35: #{tpu_custom_call.1} parent=1 // pred_check_branch
      %87 = sbr.rel (0) target = $region37
    $region36: #{tpu_custom_call.1} parent=1 // pred_region
      _
    $region37: #{tpu_custom_call.1} parent=1 // pred_fallthru
      _
    // Predicated region
    $region38: #{tpu_custom_call.1} parent=1 // pred_check
      _
    $region39: #{tpu_custom_call.1} parent=1 // pred_check_branch
      %89 = sbr.rel (0) target = $region41
    $region40: #{tpu_custom_call.1} parent=1 // pred_region
      %90 = dma.done [#allocation4], 16
    $region41: #{tpu_custom_call.1} parent=1 // pred_fallthru
      _
    // Predicated region
    $region42: #{tpu_custom_call.1} parent=1 // pred_check
      _
    $region43: #{tpu_custom_call.1} parent=1 // pred_check_branch
      %92 = sbr.rel (0) target = $region45
    $region44: #{tpu_custom_call.1} parent=1 // pred_region
      %93 = dma.done [#allocation3], 128
    $region45: #{tpu_custom_call.1} parent=1 // pred_fallthru
      _
    // Predicated region
    $region46: #{tpu_custom_call.1} parent=1 // pred_check
      _
    $region47: #{tpu_custom_call.1} parent=1 // pred_check_branch
      %95 = sbr.rel (0) target = $region49
    $region48: #{tpu_custom_call.1} parent=1 // pred_region
      %96 = dma.done [#allocation7], 1024
    $region49: #{tpu_custom_call.1} parent=1 // pred_fallthru
      _
    // Predicated region
    $region50: #{tpu_custom_call.1} parent=1 // pred_check
      _
    $region51: #{tpu_custom_call.1} parent=1 // pred_check_branch
      %98 = sbr.rel (0) target = $region53
    $region52: #{tpu_custom_call.1} parent=1 // pred_region
      %99 = dma.done [#allocation7], 512
    $region53: #{tpu_custom_call.1} parent=1 // pred_fallthru
      _
    // Predicated region
    $region54: #{tpu_custom_call.1} parent=1 // pred_check
      _
    $region55: #{tpu_custom_call.1} parent=1 // pred_check_branch
      %101 = sbr.rel (0) target = $region57
    $region56: #{tpu_custom_call.1} parent=1 // pred_region
      %102 = dma.done [#allocation10], 512
    $region57: #{tpu_custom_call.1} parent=1 // pred_fallthru
      _
    // Predicated region
    $region58: #{tpu_custom_call.1} parent=1 // pred_check
      _
    $region59: #{tpu_custom_call.1} parent=1 // pred_check_branch
      %104 = sbr.rel (0) target = $region61
    $region60: #{tpu_custom_call.1} parent=1 // pred_region
      %105 = dma.done [#allocation10], 512
    $region61: #{tpu_custom_call.1} parent=1 // pred_fallthru
      _
    %106 = sfence
    %s107 = sld [smem:[#allocation2]]
    %s108 = sld [smem:[#allocation2 + $0x1]]
    %s109 = sld [smem:[#allocation2 + $0x2]]
    %s110 = sld [smem:[#allocation2 + $0x3]]
    %v111 = vld [vmem:[#allocation5] sm:$0xff]
    %v112 = vstv %s107
    %v113 = vmul.f32 %v112, %v111
    %v114 = vstv %s108
    %v115 = vmul.f32 %v114, %v111
    %v117 = vrot.slane %v115, 1
    %v119 = vadd.f32 %v113, %v117
    %v120 = vstv %s109
    %v121 = vadd.f32 %v119, %v120
    %v122 = vld [vmem:[#allocation6] sm:$0xff]
    %v123 = vld [vmem:[#allocation6 + $0x8] sm:$0xff]
    %v124 = vld [vmem:[#allocation6 + $0x10] sm:$0xff]
    %v125 = vld [vmem:[#allocation6 + $0x18] sm:$0xff]
    %v126 = vld [vmem:[#allocation6 + $0x20] sm:$0xff]
    %v127 = vld [vmem:[#allocation6 + $0x28] sm:$0xff]
    %v128 = vld [vmem:[#allocation6 + $0x30] sm:$0xff]
    %v129 = vld [vmem:[#allocation6 + $0x38] sm:$0xff]
    %v130 = vld [vmem:[%s3] sm:$0xff]
    %v132 = vlaneseq
    %v133 = vshrl.u32 %v132, 7
    %v134 = vsub.s32 0, %v133
    %v135 = vrot.slane %v130, %v134
    %v136 = vlaneseq
    %v137 = vshrl.u32 %v136, 7
    %v138 = vsub.s32 1, %v137
    %v139 = vrot.slane %v130, %v138
    %v140 = vlaneseq
    %v141 = vshrl.u32 %v140, 7
    %v142 = vsub.s32 2, %v141
    %v143 = vrot.slane %v130, %v142
    %v144 = vlaneseq
    %v145 = vshrl.u32 %v144, 7
    %v146 = vsub.s32 3, %v145
    %v147 = vrot.slane %v130, %v146
    %v148 = vlaneseq
    %v149 = vshrl.u32 %v148, 7
    %v150 = vsub.s32 4, %v149
    %v151 = vrot.slane %v130, %v150
    %v152 = vlaneseq
    %v153 = vshrl.u32 %v152, 7
    %v154 = vsub.s32 5, %v153
    %v155 = vrot.slane %v130, %v154
    %v156 = vlaneseq
    %v157 = vshrl.u32 %v156, 7
    %v158 = vsub.s32 6, %v157
    %v159 = vrot.slane %v130, %v158
    %v160 = vlaneseq
    %v161 = vshrl.u32 %v160, 7
    %v162 = vsub.s32 7, %v161
    %v163 = vrot.slane %v130, %v162
    %vm172 = vcmask 64512
    %v174 = vsel %vm172, %v121, 0
    %176 = vmatprep.subr.mxu0 %v123
    %177 = vmatpush1.msra.mxu0 %v122
    %178 = vmatprep.subr.mxu0 0.0
    %179 = vmatpush1.msra.mxu0 0.0
    %180 = vmatprep.subr.mxu0 0.0
    %181 = vmatpush1.msra.mxu0 0.0
    %182 = vmatprep.subr.mxu0 0.0
    %183 = vmatpush1.msra.mxu0 0.0
    %184 = vmatprep.subr.mxu0 0.0
    %185 = vmatpush1.msra.mxu0 0.0
    %186 = vmatprep.subr.mxu0 0.0
    %187 = vmatpush1.msra.mxu0 0.0
    %188 = vmatprep.subr.mxu0 0.0
    %189 = vmatpush1.msra.mxu0 0.0
    %190 = vmatprep.subr.mxu0 0.0
    %191 = vmatpush1.msra.mxu0 0.0
    %192 = vmatprep.subr.mxu0 0.0
    %193 = vmatpush1.msra.mxu0 0.0
    %194 = vmatprep.subr.mxu0 0.0
    %195 = vmatpush1.msra.mxu0 0.0
    %196 = vmatprep.subr.mxu0 0.0
    %197 = vmatpush1.msra.mxu0 0.0
    %198 = vmatprep.subr.mxu0 0.0
    %199 = vmatpush1.msra.mxu0 0.0
    %200 = vmatprep.subr.mxu0 0.0
    %201 = vmatpush1.msra.mxu0 0.0
    %202 = vmatprep.subr.mxu0 0.0
    %203 = vmatpush1.msra.mxu0 0.0
    %204 = vmatprep.subr.mxu0 0.0
    %205 = vmatpush1.msra.mxu0 0.0
    %206 = vmatprep.subr.mxu0 0.0
    %207 = vmatpush1.msra.mxu0 0.0
    %208 = vmatprep.subr.mxu0 0.0
    %209 = vmatpush1.msra.mxu0 0.0
    %210 = vmatprep.subr.mxu0 0.0
    %211 = vmatpush1.msra.mxu0 0.0
    %212 = vmatprep.subr.mxu0 0.0
    %213 = vmatpush1.msra.mxu0 0.0
    %214 = vmatprep.subr.mxu0 0.0
    %215 = vmatpush1.msra.mxu0 0.0
    %216 = vmatprep.subr.mxu0 0.0
    %217 = vmatpush1.msra.mxu0 0.0
    %218 = vmatprep.subr.mxu0 0.0
    %219 = vmatpush1.msra.mxu0 0.0
    %220 = vmatprep.subr.mxu0 0.0
    %221 = vmatpush1.msra.mxu0 0.0
    %222 = vmatprep.subr.mxu0 0.0
    %223 = vmatpush1.msra.mxu0 0.0
    %224 = vmatprep.subr.mxu0 0.0
    %225 = vmatpush1.msra.mxu0 0.0
    %226 = vmatprep.subr.mxu0 0.0
    %227 = vmatpush1.msra.mxu0 0.0
    %228 = vmatprep.subr.mxu0 0.0
    %229 = vmatpush1.msra.mxu0 0.0
    %230 = vmatprep.subr.mxu0 0.0
    %231 = vmatpush1.msra.mxu0 0.0
    %232 = vmatprep.subr.mxu0 0.0
    %233 = vmatpush1.msra.mxu0 0.0
    %234 = vmatprep.subr.mxu0 0.0
    %235 = vmatpush1.msra.mxu0 0.0
    %236 = vmatprep.subr.mxu0 0.0
    %237 = vmatpush1.msra.mxu0 0.0
    %238 = vmatprep.subr.mxu0 0.0
    %239 = vmatpush1.msra.mxu0 0.0
    %240 = vmatprep.mubr.f32.mxu0 0.0
    %241 = vmatmul.mubr.f32.gmra.mrb[0].mxu0 %v174
    %v242 = vpop.f32.mrb[0].mxu0
    %v243 = vadd.f32 %v135, %v242
    %v244 = vpop.f32.mrb[0].mxu0
    %v245 = vadd.f32 %v139, %v244
    %246 = vdwg.mxu0
    %247 = vmatprep.subr.mxu0 %v125
    %248 = vmatpush1.msra.mxu0 %v124
    %249 = vmatprep.subr.mxu0 0.0
    %250 = vmatpush1.msra.mxu0 0.0
    %251 = vmatprep.subr.mxu0 0.0
    %252 = vmatpush1.msra.mxu0 0.0
    %253 = vmatprep.subr.mxu0 0.0
    %254 = vmatpush1.msra.mxu0 0.0
    %255 = vmatprep.subr.mxu0 0.0
    %256 = vmatpush1.msra.mxu0 0.0
    %257 = vmatprep.subr.mxu0 0.0
    %258 = vmatpush1.msra.mxu0 0.0
    %259 = vmatprep.subr.mxu0 0.0
    %260 = vmatpush1.msra.mxu0 0.0
    %261 = vmatprep.subr.mxu0 0.0
    %262 = vmatpush1.msra.mxu0 0.0
    %263 = vmatprep.subr.mxu0 0.0
    %264 = vmatpush1.msra.mxu0 0.0
    %265 = vmatprep.subr.mxu0 0.0
    %266 = vmatpush1.msra.mxu0 0.0
    %267 = vmatprep.subr.mxu0 0.0
    %268 = vmatpush1.msra.mxu0 0.0
    %269 = vmatprep.subr.mxu0 0.0
    %270 = vmatpush1.msra.mxu0 0.0
    %271 = vmatprep.subr.mxu0 0.0
    %272 = vmatpush1.msra.mxu0 0.0
    %273 = vmatprep.subr.mxu0 0.0
    %274 = vmatpush1.msra.mxu0 0.0
    %275 = vmatprep.subr.mxu0 0.0
    %276 = vmatpush1.msra.mxu0 0.0
    %277 = vmatprep.subr.mxu0 0.0
    %278 = vmatpush1.msra.mxu0 0.0
    %279 = vmatprep.subr.mxu0 0.0
    %280 = vmatpush1.msra.mxu0 0.0
    %281 = vmatprep.subr.mxu0 0.0
    %282 = vmatpush1.msra.mxu0 0.0
    %283 = vmatprep.subr.mxu0 0.0
    %284 = vmatpush1.msra.mxu0 0.0
    %285 = vmatprep.subr.mxu0 0.0
    %286 = vmatpush1.msra.mxu0 0.0
    %287 = vmatprep.subr.mxu0 0.0
    %288 = vmatpush1.msra.mxu0 0.0
    %289 = vmatprep.subr.mxu0 0.0
    %290 = vmatpush1.msra.mxu0 0.0
    %291 = vmatprep.subr.mxu0 0.0
    %292 = vmatpush1.msra.mxu0 0.0
    %293 = vmatprep.subr.mxu0 0.0
    %294 = vmatpush1.msra.mxu0 0.0
    %295 = vmatprep.subr.mxu0 0.0
    %296 = vmatpush1.msra.mxu0 0.0
    %297 = vmatprep.subr.mxu0 0.0
    %298 = vmatpush1.msra.mxu0 0.0
    %299 = vmatprep.subr.mxu0 0.0
    %300 = vmatpush1.msra.mxu0 0.0
    %301 = vmatprep.subr.mxu0 0.0
    %302 = vmatpush1.msra.mxu0 0.0
    %303 = vmatprep.subr.mxu0 0.0
    %304 = vmatpush1.msra.mxu0 0.0
    %305 = vmatprep.subr.mxu0 0.0
    %306 = vmatpush1.msra.mxu0 0.0
    %307 = vmatprep.subr.mxu0 0.0
    %308 = vmatpush1.msra.mxu0 0.0
    %309 = vmatprep.subr.mxu0 0.0
    %310 = vmatpush1.msra.mxu0 0.0
    %311 = vmatprep.mubr.f32.mxu0 0.0
    %312 = vmatmul.mubr.f32.gmra.mrb[0].mxu0 %v174
    %v313 = vpop.f32.mrb[0].mxu0
    %v314 = vadd.f32 %v143, %v313
    %v315 = vpop.f32.mrb[0].mxu0
    %v316 = vadd.f32 %v147, %v315
    %317 = vdwg.mxu0
    %318 = vmatprep.subr.mxu0 %v127
    %319 = vmatpush1.msra.mxu0 %v126
    %320 = vmatprep.subr.mxu0 0.0
    %321 = vmatpush1.msra.mxu0 0.0
    %322 = vmatprep.subr.mxu0 0.0
    %323 = vmatpush1.msra.mxu0 0.0
    %324 = vmatprep.subr.mxu0 0.0
    %325 = vmatpush1.msra.mxu0 0.0
    %326 = vmatprep.subr.mxu0 0.0
    %327 = vmatpush1.msra.mxu0 0.0
    %328 = vmatprep.subr.mxu0 0.0
    %329 = vmatpush1.msra.mxu0 0.0
    %330 = vmatprep.subr.mxu0 0.0
    %331 = vmatpush1.msra.mxu0 0.0
    %332 = vmatprep.subr.mxu0 0.0
    %333 = vmatpush1.msra.mxu0 0.0
    %334 = vmatprep.subr.mxu0 0.0
    %335 = vmatpush1.msra.mxu0 0.0
    %336 = vmatprep.subr.mxu0 0.0
    %337 = vmatpush1.msra.mxu0 0.0
    %338 = vmatprep.subr.mxu0 0.0
    %339 = vmatpush1.msra.mxu0 0.0
    %340 = vmatprep.subr.mxu0 0.0
    %341 = vmatpush1.msra.mxu0 0.0
    %342 = vmatprep.subr.mxu0 0.0
    %343 = vmatpush1.msra.mxu0 0.0
    %344 = vmatprep.subr.mxu0 0.0
    %345 = vmatpush1.msra.mxu0 0.0
    %346 = vmatprep.subr.mxu0 0.0
    %347 = vmatpush1.msra.mxu0 0.0
    %348 = vmatprep.subr.mxu0 0.0
    %349 = vmatpush1.msra.mxu0 0.0
    %350 = vmatprep.subr.mxu0 0.0
    %351 = vmatpush1.msra.mxu0 0.0
    %352 = vmatprep.subr.mxu0 0.0
    %353 = vmatpush1.msra.mxu0 0.0
    %354 = vmatprep.subr.mxu0 0.0
    %355 = vmatpush1.msra.mxu0 0.0
    %356 = vmatprep.subr.mxu0 0.0
    %357 = vmatpush1.msra.mxu0 0.0
    %358 = vmatprep.subr.mxu0 0.0
    %359 = vmatpush1.msra.mxu0 0.0
    %360 = vmatprep.subr.mxu0 0.0
    %361 = vmatpush1.msra.mxu0 0.0
    %362 = vmatprep.subr.mxu0 0.0
    %363 = vmatpush1.msra.mxu0 0.0
    %364 = vmatprep.subr.mxu0 0.0
    %365 = vmatpush1.msra.mxu0 0.0
    %366 = vmatprep.subr.mxu0 0.0
    %367 = vmatpush1.msra.mxu0 0.0
    %368 = vmatprep.subr.mxu0 0.0
    %369 = vmatpush1.msra.mxu0 0.0
    %370 = vmatprep.subr.mxu0 0.0
    %371 = vmatpush1.msra.mxu0 0.0
    %372 = vmatprep.subr.mxu0 0.0
    %373 = vmatpush1.msra.mxu0 0.0
    %374 = vmatprep.subr.mxu0 0.0
    %375 = vmatpush1.msra.mxu0 0.0
    %376 = vmatprep.subr.mxu0 0.0
    %377 = vmatpush1.msra.mxu0 0.0
    %378 = vmatprep.subr.mxu0 0.0
    %379 = vmatpush1.msra.mxu0 0.0
    %380 = vmatprep.subr.mxu0 0.0
    %381 = vmatpush1.msra.mxu0 0.0
    %382 = vmatprep.mubr.f32.mxu0 0.0
    %383 = vmatmul.mubr.f32.gmra.mrb[0].mxu0 %v174
    %v384 = vpop.f32.mrb[0].mxu0
    %v385 = vadd.f32 %v151, %v384
    %v386 = vpop.f32.mrb[0].mxu0
    %v387 = vadd.f32 %v155, %v386
    %388 = vdwg.mxu0
    %389 = vmatprep.subr.mxu0 %v129
    %390 = vmatpush1.msra.mxu0 %v128
    %391 = vmatprep.subr.mxu0 0.0
    %392 = vmatpush1.msra.mxu0 0.0
    %393 = vmatprep.subr.mxu0 0.0
    %394 = vmatpush1.msra.mxu0 0.0
    %395 = vmatprep.subr.mxu0 0.0
    %396 = vmatpush1.msra.mxu0 0.0
    %397 = vmatprep.subr.mxu0 0.0
    %398 = vmatpush1.msra.mxu0 0.0
    %399 = vmatprep.subr.mxu0 0.0
    %400 = vmatpush1.msra.mxu0 0.0
    %401 = vmatprep.subr.mxu0 0.0
    %402 = vmatpush1.msra.mxu0 0.0
    %403 = vmatprep.subr.mxu0 0.0
    %404 = vmatpush1.msra.mxu0 0.0
    %405 = vmatprep.subr.mxu0 0.0
    %406 = vmatpush1.msra.mxu0 0.0
    %407 = vmatprep.subr.mxu0 0.0
    %408 = vmatpush1.msra.mxu0 0.0
    %409 = vmatprep.subr.mxu0 0.0
    %410 = vmatpush1.msra.mxu0 0.0
    %411 = vmatprep.subr.mxu0 0.0
    %412 = vmatpush1.msra.mxu0 0.0
    %413 = vmatprep.subr.mxu0 0.0
    %414 = vmatpush1.msra.mxu0 0.0
    %415 = vmatprep.subr.mxu0 0.0
    %416 = vmatpush1.msra.mxu0 0.0
    %417 = vmatprep.subr.mxu0 0.0
    %418 = vmatpush1.msra.mxu0 0.0
    %419 = vmatprep.subr.mxu0 0.0
    %420 = vmatpush1.msra.mxu0 0.0
    %421 = vmatprep.subr.mxu0 0.0
    %422 = vmatpush1.msra.mxu0 0.0
    %423 = vmatprep.subr.mxu0 0.0
    %424 = vmatpush1.msra.mxu0 0.0
    %425 = vmatprep.subr.mxu0 0.0
    %426 = vmatpush1.msra.mxu0 0.0
    %427 = vmatprep.subr.mxu0 0.0
    %428 = vmatpush1.msra.mxu0 0.0
    %429 = vmatprep.subr.mxu0 0.0
    %430 = vmatpush1.msra.mxu0 0.0
    %431 = vmatprep.subr.mxu0 0.0
    %432 = vmatpush1.msra.mxu0 0.0
    %433 = vmatprep.subr.mxu0 0.0
    %434 = vmatpush1.msra.mxu0 0.0
    %435 = vmatprep.subr.mxu0 0.0
    %436 = vmatpush1.msra.mxu0 0.0
    %437 = vmatprep.subr.mxu0 0.0
    %438 = vmatpush1.msra.mxu0 0.0
    %439 = vmatprep.subr.mxu0 0.0
    %440 = vmatpush1.msra.mxu0 0.0
    %441 = vmatprep.subr.mxu0 0.0
    %442 = vmatpush1.msra.mxu0 0.0
    %443 = vmatprep.subr.mxu0 0.0
    %444 = vmatpush1.msra.mxu0 0.0
    %445 = vmatprep.subr.mxu0 0.0
    %446 = vmatpush1.msra.mxu0 0.0
    %447 = vmatprep.subr.mxu0 0.0
    %448 = vmatpush1.msra.mxu0 0.0
    %449 = vmatprep.subr.mxu0 0.0
    %450 = vmatpush1.msra.mxu0 0.0
    %451 = vmatprep.subr.mxu0 0.0
    %452 = vmatpush1.msra.mxu0 0.0
    %453 = vmatprep.mubr.f32.mxu0 0.0
    %454 = vmatmul.mubr.f32.gmra.mrb[0].mxu0 %v174
    %v455 = vpop.f32.mrb[0].mxu0
    %v456 = vadd.f32 %v159, %v455
    %v457 = vpop.f32.mrb[0].mxu0
    %v458 = vadd.f32 %v163, %v457
    %459 = vdwg.mxu0
    %v460 = vld [vmem:[#allocation8] sm:$0xff]
    %v461 = vld [vmem:[#allocation8 + $0x8] sm:$0xff]
    %v462 = vld [vmem:[#allocation8 + $0x10] sm:$0xff]
    %v463 = vld [vmem:[#allocation8 + $0x18] sm:$0xff]
    %v464 = vld [vmem:[#allocation9] sm:$0xff]
    %v465 = vld [vmem:[#allocation9 + $0x8] sm:$0xff]
    %v466 = vld [vmem:[#allocation9 + $0x10] sm:$0xff]
    %v467 = vld [vmem:[#allocation9 + $0x18] sm:$0xff]
    %v468 = vld [vmem:[#allocation11] sm:$0xff]
    %v469 = vld [vmem:[#allocation11 + $0x8] sm:$0xff]
    %v470 = vld [vmem:[#allocation11 + $0x10] sm:$0xff]
    %v471 = vld [vmem:[#allocation11 + $0x18] sm:$0xff]
    %v472 = vld [vmem:[%s7] sm:$0x1]
    %v473 = vxor.u32 %v243, 2147483648
    %v474 = vmul.f32 %v473, 1.442695
    %v475 = vpow.pop %v474
    %v476 = vadd.f32 %v475, 1.0
    %v477 = vrcp.pop %v476
    %v478 = vmul.f32 1.0, %v477
    %v479 = vtanh.pop %v243
    %v480 = vmul.f32 %v478, 0.0
    %482 = vrot.lane.b32.xlu0 %v479, 64
    %v483 = vpop.permute.xlu0 %482
    %v485 = vmul.f32 %v478, %v483
    %487 = vrot.lane.b32.xlu0 %v485, 32
    %v488 = vpop.permute.xlu0 %487
    %v490 = vadd.f32 %v480, %v488
    %v491 = vtanh.pop %v490
    %493 = vrot.lane.b32.xlu0 %v491, 64
    %v494 = vpop.permute.xlu0 %493
    %v496 = vmul.f32 %v478, %v494
    %v498 = vlaneseq
    %v499 = vshrl.u32 %v498, 7
    %v500 = vsub.s32 0, %v499
    %v501 = vrot.slane %v472, %v500
    %504 = vrot.lane.b32.xlu0 %v496, 32
    %v505 = vpop.permute.xlu0 %504
    %vm506 = vcmask 261120
    %v507 = vsel %vm506, %v505, 0
    %509 = vmatprep.subr.mxu0 0.0
    %510 = vmatpush1.msra.mxu0 %v468
    %511 = vmatprep.subr.mxu0 0.0
    %512 = vmatpush1.msra.mxu0 %v469
    %513 = vmatprep.subr.mxu0 0.0
    %514 = vmatpush1.msra.mxu0 %v470
    %515 = vmatprep.subr.mxu0 0.0
    %516 = vmatpush1.msra.mxu0 %v471
    %517 = vmatprep.subr.mxu0 0.0
    %518 = vmatpush1.msra.mxu0 0.0
    %519 = vmatprep.subr.mxu0 0.0
    %520 = vmatpush1.msra.mxu0 0.0
    %521 = vmatprep.subr.mxu0 0.0
    %522 = vmatpush1.msra.mxu0 0.0
    %523 = vmatprep.subr.mxu0 0.0
    %524 = vmatpush1.msra.mxu0 0.0
    %525 = vmatprep.subr.mxu0 0.0
    %526 = vmatpush1.msra.mxu0 0.0
    %527 = vmatprep.subr.mxu0 0.0
    %528 = vmatpush1.msra.mxu0 0.0
    %529 = vmatprep.subr.mxu0 0.0
    %530 = vmatpush1.msra.mxu0 0.0
    %531 = vmatprep.subr.mxu0 0.0
    %532 = vmatpush1.msra.mxu0 0.0
    %533 = vmatprep.subr.mxu0 0.0
    %534 = vmatpush1.msra.mxu0 0.0
    %535 = vmatprep.subr.mxu0 0.0
    %536 = vmatpush1.msra.mxu0 0.0
    %537 = vmatprep.subr.mxu0 0.0
    %538 = vmatpush1.msra.mxu0 0.0
    %539 = vmatprep.subr.mxu0 0.0
    %540 = vmatpush1.msra.mxu0 0.0
    %541 = vmatprep.subr.mxu0 0.0
    %542 = vmatpush1.msra.mxu0 0.0
    %543 = vmatprep.subr.mxu0 0.0
    %544 = vmatpush1.msra.mxu0 0.0
    %545 = vmatprep.subr.mxu0 0.0
    %546 = vmatpush1.msra.mxu0 0.0
    %547 = vmatprep.subr.mxu0 0.0
    %548 = vmatpush1.msra.mxu0 0.0
    %549 = vmatprep.subr.mxu0 0.0
    %550 = vmatpush1.msra.mxu0 0.0
    %551 = vmatprep.subr.mxu0 0.0
    %552 = vmatpush1.msra.mxu0 0.0
    %553 = vmatprep.subr.mxu0 0.0
    %554 = vmatpush1.msra.mxu0 0.0
    %555 = vmatprep.subr.mxu0 0.0
    %556 = vmatpush1.msra.mxu0 0.0
    %557 = vmatprep.subr.mxu0 0.0
    %558 = vmatpush1.msra.mxu0 0.0
    %559 = vmatprep.subr.mxu0 0.0
    %560 = vmatpush1.msra.mxu0 0.0
    %561 = vmatprep.subr.mxu0 0.0
    %562 = vmatpush1.msra.mxu0 0.0
    %563 = vmatprep.subr.mxu0 0.0
    %564 = vmatpush1.msra.mxu0 0.0
    %565 = vmatprep.subr.mxu0 0.0
    %566 = vmatpush1.msra.mxu0 0.0
    %567 = vmatprep.subr.mxu0 0.0
    %568 = vmatpush1.msra.mxu0 0.0
    %569 = vmatprep.subr.mxu0 0.0
    %570 = vmatpush1.msra.mxu0 0.0
    %571 = vmatprep.subr.mxu0 0.0
    %572 = vmatpush1.msra.mxu0 0.0
    %573 = vmatprep.mubr.f32.mxu0 0.0
    %574 = vmatmul.mubr.f32.gmra.mrb[0].mxu0 %v507
    %v575 = vpop.f32.mrb[0].mxu0
    %v576 = vadd.f32 %v501, %v575
    %v577 = vpop.f32.mrb[0].mxu0
    %578 = vdwg.mxu0
    %v579 = vxor.u32 %v576, 2147483648
    %v580 = vmul.f32 %v579, 1.442695
    %v581 = vpow.pop %v580
    %v582 = vadd.f32 %v581, 1.0
    %v583 = vrcp.pop %v582
    %v584 = vmul.f32 1.0, %v583
    %v585 = vtanh.pop %v576
    %v586 = vmul.f32 %v584, 0.0
    %588 = vrot.lane.b32.xlu0 %v585, 64
    %v589 = vpop.permute.xlu0 %588
    %v591 = vmul.f32 %v584, %v589
    %593 = vrot.lane.b32.xlu0 %v591, 32
    %v594 = vpop.permute.xlu0 %593
    %v596 = vadd.f32 %v586, %v594
    %v597 = vtanh.pop %v596
    %599 = vrot.lane.b32.xlu0 %v597, 64
    %v600 = vpop.permute.xlu0 %599
    %v602 = vmul.f32 %v584, %v600
    %603 = vmatprep.subr.mxu0 0.0
    %604 = vmatpush1.msra.mxu0 %v460
    %605 = vmatprep.subr.mxu0 0.0
    %606 = vmatpush1.msra.mxu0 %v461
    %607 = vmatprep.subr.mxu0 0.0
    %608 = vmatpush1.msra.mxu0 %v462
    %609 = vmatprep.subr.mxu0 0.0
    %610 = vmatpush1.msra.mxu0 %v463
    %611 = vmatprep.subr.mxu0 0.0
    %612 = vmatpush1.msra.mxu0 0.0
    %613 = vmatprep.subr.mxu0 0.0
    %614 = vmatpush1.msra.mxu0 0.0
    %615 = vmatprep.subr.mxu0 0.0
    %616 = vmatpush1.msra.mxu0 0.0
    %617 = vmatprep.subr.mxu0 0.0
    %618 = vmatpush1.msra.mxu0 0.0
    %619 = vmatprep.subr.mxu0 0.0
    %620 = vmatpush1.msra.mxu0 0.0
    %621 = vmatprep.subr.mxu0 0.0
    %622 = vmatpush1.msra.mxu0 0.0
    %623 = vmatprep.subr.mxu0 0.0
    %624 = vmatpush1.msra.mxu0 0.0
    %625 = vmatprep.subr.mxu0 0.0
    %626 = vmatpush1.msra.mxu0 0.0
    %627 = vmatprep.subr.mxu0 0.0
    %628 = vmatpush1.msra.mxu0 0.0
    %629 = vmatprep.subr.mxu0 0.0
    %630 = vmatpush1.msra.mxu0 0.0
    %631 = vmatprep.subr.mxu0 0.0
    %632 = vmatpush1.msra.mxu0 0.0
    %633 = vmatprep.subr.mxu0 0.0
    %634 = vmatpush1.msra.mxu0 0.0
    %635 = vmatprep.subr.mxu0 0.0
    %636 = vmatpush1.msra.mxu0 0.0
    %637 = vmatprep.subr.mxu0 0.0
    %638 = vmatpush1.msra.mxu0 0.0
    %639 = vmatprep.subr.mxu0 0.0
    %640 = vmatpush1.msra.mxu0 0.0
    %641 = vmatprep.subr.mxu0 0.0
    %642 = vmatpush1.msra.mxu0 0.0
    %643 = vmatprep.subr.mxu0 0.0
    %644 = vmatpush1.msra.mxu0 0.0
    %645 = vmatprep.subr.mxu0 0.0
    %646 = vmatpush1.msra.mxu0 0.0
    %647 = vmatprep.subr.mxu0 0.0
    %648 = vmatpush1.msra.mxu0 0.0
    %649 = vmatprep.subr.mxu0 0.0
    %650 = vmatpush1.msra.mxu0 0.0
    %651 = vmatprep.subr.mxu0 0.0
    %652 = vmatpush1.msra.mxu0 0.0
    %653 = vmatprep.subr.mxu0 0.0
    %654 = vmatpush1.msra.mxu0 0.0
    %655 = vmatprep.subr.mxu0 0.0
    %656 = vmatpush1.msra.mxu0 0.0
    %657 = vmatprep.subr.mxu0 0.0
    %658 = vmatpush1.msra.mxu0 0.0
    %659 = vmatprep.subr.mxu0 0.0
    %660 = vmatpush1.msra.mxu0 0.0
    %661 = vmatprep.subr.mxu0 0.0
    %662 = vmatpush1.msra.mxu0 0.0
    %663 = vmatprep.subr.mxu0 0.0
    %664 = vmatpush1.msra.mxu0 0.0
    %665 = vmatprep.subr.mxu0 0.0
    %666 = vmatpush1.msra.mxu0 0.0
    %667 = vmatprep.mubr.f32.mxu0 0.0
    %668 = vmatmul.mubr.f32.gmra.mrb[0].mxu0 %v507
    %v669 = vpop.f32.mrb[0].mxu0
    %v670 = vadd.f32 0.0, %v669
    %v671 = vpop.f32.mrb[0].mxu0
    %672 = vdwg.mxu0
    %674 = vrot.lane.b32.xlu0 %v602, 32
    %v675 = vpop.permute.xlu0 %674
    %v676 = vsel %vm506, %v675, 0
    %678 = vmatprep.subr.mxu0 0.0
    %679 = vmatpush1.msra.mxu0 %v464
    %680 = vmatprep.subr.mxu0 0.0
    %681 = vmatpush1.msra.mxu0 %v465
    %682 = vmatprep.subr.mxu0 0.0
    %683 = vmatpush1.msra.mxu0 %v466
    %684 = vmatprep.subr.mxu0 0.0
    %685 = vmatpush1.msra.mxu0 %v467
    %686 = vmatprep.subr.mxu0 0.0
    %687 = vmatpush1.msra.mxu0 0.0
    %688 = vmatprep.subr.mxu0 0.0
    %689 = vmatpush1.msra.mxu0 0.0
    %690 = vmatprep.subr.mxu0 0.0
    %691 = vmatpush1.msra.mxu0 0.0
    %692 = vmatprep.subr.mxu0 0.0
    %693 = vmatpush1.msra.mxu0 0.0
    %694 = vmatprep.subr.mxu0 0.0
    %695 = vmatpush1.msra.mxu0 0.0
    %696 = vmatprep.subr.mxu0 0.0
    %697 = vmatpush1.msra.mxu0 0.0
    %698 = vmatprep.subr.mxu0 0.0
    %699 = vmatpush1.msra.mxu0 0.0
    %700 = vmatprep.subr.mxu0 0.0
    %701 = vmatpush1.msra.mxu0 0.0
    %702 = vmatprep.subr.mxu0 0.0
    %703 = vmatpush1.msra.mxu0 0.0
    %704 = vmatprep.subr.mxu0 0.0
    %705 = vmatpush1.msra.mxu0 0.0
    %706 = vmatprep.subr.mxu0 0.0
    %707 = vmatpush1.msra.mxu0 0.0
    %708 = vmatprep.subr.mxu0 0.0
    %709 = vmatpush1.msra.mxu0 0.0
    %710 = vmatprep.subr.mxu0 0.0
    %711 = vmatpush1.msra.mxu0 0.0
    %712 = vmatprep.subr.mxu0 0.0
    %713 = vmatpush1.msra.mxu0 0.0
    %714 = vmatprep.subr.mxu0 0.0
    %715 = vmatpush1.msra.mxu0 0.0
    %716 = vmatprep.subr.mxu0 0.0
    %717 = vmatpush1.msra.mxu0 0.0
    %718 = vmatprep.subr.mxu0 0.0
    %719 = vmatpush1.msra.mxu0 0.0
    %720 = vmatprep.subr.mxu0 0.0
    %721 = vmatpush1.msra.mxu0 0.0
    %722 = vmatprep.subr.mxu0 0.0
    %723 = vmatpush1.msra.mxu0 0.0
    %724 = vmatprep.subr.mxu0 0.0
    %725 = vmatpush1.msra.mxu0 0.0
    %726 = vmatprep.subr.mxu0 0.0
    %727 = vmatpush1.msra.mxu0 0.0
    %728 = vmatprep.subr.mxu0 0.0
    %729 = vmatpush1.msra.mxu0 0.0
    %730 = vmatprep.subr.mxu0 0.0
    %731 = vmatpush1.msra.mxu0 0.0
    %732 = vmatprep.subr.mxu0 0.0
    %733 = vmatpush1.msra.mxu0 0.0
    %734 = vmatprep.subr.mxu0 0.0
    %735 = vmatpush1.msra.mxu0 0.0
    %736 = vmatprep.subr.mxu0 0.0
    %737 = vmatpush1.msra.mxu0 0.0
    %738 = vmatprep.subr.mxu0 0.0
    %739 = vmatpush1.msra.mxu0 0.0
    %740 = vmatprep.subr.mxu0 0.0
    %741 = vmatpush1.msra.mxu0 0.0
    %742 = vmatprep.mubr.f32.mxu0 0.0
    %743 = vmatmul.mubr.f32.gmra.mrb[0].mxu0 %v676
    %v744 = vpop.f32.mrb[0].mxu0
    %v745 = vadd.f32 0.0, %v744
    %v746 = vpop.f32.mrb[0].mxu0
    %747 = vdwg.mxu0
    %v748 = vadd.f32 %v245, %v670
    %v749 = vxor.u32 %v748, 2147483648
    %v750 = vmul.f32 %v749, 1.442695
    %v751 = vpow.pop %v750
    %v752 = vadd.f32 %v751, 1.0
    %v753 = vrcp.pop %v752
    %v754 = vmul.f32 1.0, %v753
    %v755 = vtanh.pop %v748
    %v756 = vmul.f32 %v754, %v490
    %758 = vrot.lane.b32.xlu0 %v755, 64
    %v759 = vpop.permute.xlu0 %758
    %v761 = vmul.f32 %v754, %v759
    %763 = vrot.lane.b32.xlu0 %v761, 32
    %v764 = vpop.permute.xlu0 %763
    %v766 = vadd.f32 %v756, %v764
    %v767 = vtanh.pop %v766
    %769 = vrot.lane.b32.xlu0 %v767, 64
    %v770 = vpop.permute.xlu0 %769
    %v772 = vmul.f32 %v754, %v770
    %774 = vrot.lane.b32.xlu0 %v772, 32
    %v775 = vpop.permute.xlu0 %774
    %v776 = vsel %vm506, %v775, 0
    %778 = vmatprep.subr.mxu0 0.0
    %779 = vmatpush1.msra.mxu0 %v468
    %780 = vmatprep.subr.mxu0 0.0
    %781 = vmatpush1.msra.mxu0 %v469
    %782 = vmatprep.subr.mxu0 0.0
    %783 = vmatpush1.msra.mxu0 %v470
    %784 = vmatprep.subr.mxu0 0.0
    %785 = vmatpush1.msra.mxu0 %v471
    %786 = vmatprep.subr.mxu0 0.0
    %787 = vmatpush1.msra.mxu0 0.0
    %788 = vmatprep.subr.mxu0 0.0
    %789 = vmatpush1.msra.mxu0 0.0
    %790 = vmatprep.subr.mxu0 0.0
    %791 = vmatpush1.msra.mxu0 0.0
    %792 = vmatprep.subr.mxu0 0.0
    %793 = vmatpush1.msra.mxu0 0.0
    %794 = vmatprep.subr.mxu0 0.0
    %795 = vmatpush1.msra.mxu0 0.0
    %796 = vmatprep.subr.mxu0 0.0
    %797 = vmatpush1.msra.mxu0 0.0
    %798 = vmatprep.subr.mxu0 0.0
    %799 = vmatpush1.msra.mxu0 0.0
    %800 = vmatprep.subr.mxu0 0.0
    %801 = vmatpush1.msra.mxu0 0.0
    %802 = vmatprep.subr.mxu0 0.0
    %803 = vmatpush1.msra.mxu0 0.0
    %804 = vmatprep.subr.mxu0 0.0
    %805 = vmatpush1.msra.mxu0 0.0
    %806 = vmatprep.subr.mxu0 0.0
    %807 = vmatpush1.msra.mxu0 0.0
    %808 = vmatprep.subr.mxu0 0.0
    %809 = vmatpush1.msra.mxu0 0.0
    %810 = vmatprep.subr.mxu0 0.0
    %811 = vmatpush1.msra.mxu0 0.0
    %812 = vmatprep.subr.mxu0 0.0
    %813 = vmatpush1.msra.mxu0 0.0
    %814 = vmatprep.subr.mxu0 0.0
    %815 = vmatpush1.msra.mxu0 0.0
    %816 = vmatprep.subr.mxu0 0.0
    %817 = vmatpush1.msra.mxu0 0.0
    %818 = vmatprep.subr.mxu0 0.0
    %819 = vmatpush1.msra.mxu0 0.0
    %820 = vmatprep.subr.mxu0 0.0
    %821 = vmatpush1.msra.mxu0 0.0
    %822 = vmatprep.subr.mxu0 0.0
    %823 = vmatpush1.msra.mxu0 0.0
    %824 = vmatprep.subr.mxu0 0.0
    %825 = vmatpush1.msra.mxu0 0.0
    %826 = vmatprep.subr.mxu0 0.0
    %827 = vmatpush1.msra.mxu0 0.0
    %828 = vmatprep.subr.mxu0 0.0
    %829 = vmatpush1.msra.mxu0 0.0
    %830 = vmatprep.subr.mxu0 0.0
    %831 = vmatpush1.msra.mxu0 0.0
    %832 = vmatprep.subr.mxu0 0.0
    %833 = vmatpush1.msra.mxu0 0.0
    %834 = vmatprep.subr.mxu0 0.0
    %835 = vmatpush1.msra.mxu0 0.0
    %836 = vmatprep.subr.mxu0 0.0
    %837 = vmatpush1.msra.mxu0 0.0
    %838 = vmatprep.subr.mxu0 0.0
    %839 = vmatpush1.msra.mxu0 0.0
    %840 = vmatprep.subr.mxu0 0.0
    %841 = vmatpush1.msra.mxu0 0.0
    %842 = vmatprep.mubr.f32.mxu0 0.0
    %843 = vmatmul.mubr.f32.gmra.mrb[0].mxu0 %v776
    %v844 = vpop.f32.mrb[0].mxu0
    %v845 = vadd.f32 %v501, %v844
    %v846 = vpop.f32.mrb[0].mxu0
    %847 = vdwg.mxu0
    %v848 = vadd.f32 %v845, %v745
    %v849 = vxor.u32 %v848, 2147483648
    %v850 = vmul.f32 %v849, 1.442695
    %v851 = vpow.pop %v850
    %v852 = vadd.f32 %v851, 1.0
    %v853 = vrcp.pop %v852
    %v854 = vmul.f32 1.0, %v853
    %v855 = vtanh.pop %v848
    %v856 = vmul.f32 %v854, %v596
    %858 = vrot.lane.b32.xlu0 %v855, 64
    %v859 = vpop.permute.xlu0 %858
    %v861 = vmul.f32 %v854, %v859
    %863 = vrot.lane.b32.xlu0 %v861, 32
    %v864 = vpop.permute.xlu0 %863
    %v866 = vadd.f32 %v856, %v864
    %v867 = vtanh.pop %v866
    %869 = vrot.lane.b32.xlu0 %v867, 64
    %v870 = vpop.permute.xlu0 %869
    %v872 = vmul.f32 %v854, %v870
    %873 = vmatprep.subr.mxu0 0.0
    %874 = vmatpush1.msra.mxu0 %v460
    %875 = vmatprep.subr.mxu0 0.0
    %876 = vmatpush1.msra.mxu0 %v461
    %877 = vmatprep.subr.mxu0 0.0
    %878 = vmatpush1.msra.mxu0 %v462
    %879 = vmatprep.subr.mxu0 0.0
    %880 = vmatpush1.msra.mxu0 %v463
    %881 = vmatprep.subr.mxu0 0.0
    %882 = vmatpush1.msra.mxu0 0.0
    %883 = vmatprep.subr.mxu0 0.0
    %884 = vmatpush1.msra.mxu0 0.0
    %885 = vmatprep.subr.mxu0 0.0
    %886 = vmatpush1.msra.mxu0 0.0
    %887 = vmatprep.subr.mxu0 0.0
    %888 = vmatpush1.msra.mxu0 0.0
    %889 = vmatprep.subr.mxu0 0.0
    %890 = vmatpush1.msra.mxu0 0.0
    %891 = vmatprep.subr.mxu0 0.0
    %892 = vmatpush1.msra.mxu0 0.0
    %893 = vmatprep.subr.mxu0 0.0
    %894 = vmatpush1.msra.mxu0 0.0
    %895 = vmatprep.subr.mxu0 0.0
    %896 = vmatpush1.msra.mxu0 0.0
    %897 = vmatprep.subr.mxu0 0.0
    %898 = vmatpush1.msra.mxu0 0.0
    %899 = vmatprep.subr.mxu0 0.0
    %900 = vmatpush1.msra.mxu0 0.0
    %901 = vmatprep.subr.mxu0 0.0
    %902 = vmatpush1.msra.mxu0 0.0
    %903 = vmatprep.subr.mxu0 0.0
    %904 = vmatpush1.msra.mxu0 0.0
    %905 = vmatprep.subr.mxu0 0.0
    %906 = vmatpush1.msra.mxu0 0.0
    %907 = vmatprep.subr.mxu0 0.0
    %908 = vmatpush1.msra.mxu0 0.0
    %909 = vmatprep.subr.mxu0 0.0
    %910 = vmatpush1.msra.mxu0 0.0
    %911 = vmatprep.subr.mxu0 0.0
    %912 = vmatpush1.msra.mxu0 0.0
    %913 = vmatprep.subr.mxu0 0.0
    %914 = vmatpush1.msra.mxu0 0.0
    %915 = vmatprep.subr.mxu0 0.0
    %916 = vmatpush1.msra.mxu0 0.0
    %917 = vmatprep.subr.mxu0 0.0
    %918 = vmatpush1.msra.mxu0 0.0
    %919 = vmatprep.subr.mxu0 0.0
    %920 = vmatpush1.msra.mxu0 0.0
    %921 = vmatprep.subr.mxu0 0.0
    %922 = vmatpush1.msra.mxu0 0.0
    %923 = vmatprep.subr.mxu0 0.0
    %924 = vmatpush1.msra.mxu0 0.0
    %925 = vmatprep.subr.mxu0 0.0
    %926 = vmatpush1.msra.mxu0 0.0
    %927 = vmatprep.subr.mxu0 0.0
    %928 = vmatpush1.msra.mxu0 0.0
    %929 = vmatprep.subr.mxu0 0.0
    %930 = vmatpush1.msra.mxu0 0.0
    %931 = vmatprep.subr.mxu0 0.0
    %932 = vmatpush1.msra.mxu0 0.0
    %933 = vmatprep.subr.mxu0 0.0
    %934 = vmatpush1.msra.mxu0 0.0
    %935 = vmatprep.subr.mxu0 0.0
    %936 = vmatpush1.msra.mxu0 0.0
    %937 = vmatprep.mubr.f32.mxu0 0.0
    %938 = vmatmul.mubr.f32.gmra.mrb[0].mxu0 %v776
    %v939 = vpop.f32.mrb[0].mxu0
    %v940 = vadd.f32 0.0, %v939
    %v941 = vpop.f32.mrb[0].mxu0
    %942 = vdwg.mxu0
    %944 = vrot.lane.b32.xlu0 %v872, 32
    %v945 = vpop.permute.xlu0 %944
    %v946 = vsel %vm506, %v945, 0
    %948 = vmatprep.subr.mxu0 0.0
    %949 = vmatpush1.msra.mxu0 %v464
    %950 = vmatprep.subr.mxu0 0.0
    %951 = vmatpush1.msra.mxu0 %v465
    %952 = vmatprep.subr.mxu0 0.0
    %953 = vmatpush1.msra.mxu0 %v466
    %954 = vmatprep.subr.mxu0 0.0
    %955 = vmatpush1.msra.mxu0 %v467
    %956 = vmatprep.subr.mxu0 0.0
    %957 = vmatpush1.msra.mxu0 0.0
    %958 = vmatprep.subr.mxu0 0.0
    %959 = vmatpush1.msra.mxu0 0.0
    %960 = vmatprep.subr.mxu0 0.0
    %961 = vmatpush1.msra.mxu0 0.0
    %962 = vmatprep.subr.mxu0 0.0
    %963 = vmatpush1.msra.mxu0 0.0
    %964 = vmatprep.subr.mxu0 0.0
    %965 = vmatpush1.msra.mxu0 0.0
    %966 = vmatprep.subr.mxu0 0.0
    %967 = vmatpush1.msra.mxu0 0.0
    %968 = vmatprep.subr.mxu0 0.0
    %969 = vmatpush1.msra.mxu0 0.0
    %970 = vmatprep.subr.mxu0 0.0
    %971 = vmatpush1.msra.mxu0 0.0
    %972 = vmatprep.subr.mxu0 0.0
    %973 = vmatpush1.msra.mxu0 0.0
    %974 = vmatprep.subr.mxu0 0.0
    %975 = vmatpush1.msra.mxu0 0.0
    %976 = vmatprep.subr.mxu0 0.0
    %977 = vmatpush1.msra.mxu0 0.0
    %978 = vmatprep.subr.mxu0 0.0
    %979 = vmatpush1.msra.mxu0 0.0
    %980 = vmatprep.subr.mxu0 0.0
    %981 = vmatpush1.msra.mxu0 0.0
    %982 = vmatprep.subr.mxu0 0.0
    %983 = vmatpush1.msra.mxu0 0.0
    %984 = vmatprep.subr.mxu0 0.0
    %985 = vmatpush1.msra.mxu0 0.0
    %986 = vmatprep.subr.mxu0 0.0
    %987 = vmatpush1.msra.mxu0 0.0
    %988 = vmatprep.subr.mxu0 0.0
    %989 = vmatpush1.msra.mxu0 0.0
    %990 = vmatprep.subr.mxu0 0.0
    %991 = vmatpush1.msra.mxu0 0.0
    %992 = vmatprep.subr.mxu0 0.0
    %993 = vmatpush1.msra.mxu0 0.0
    %994 = vmatprep.subr.mxu0 0.0
    %995 = vmatpush1.msra.mxu0 0.0
    %996 = vmatprep.subr.mxu0 0.0
    %997 = vmatpush1.msra.mxu0 0.0
    %998 = vmatprep.subr.mxu0 0.0
    %999 = vmatpush1.msra.mxu0 0.0
    %1000 = vmatprep.subr.mxu0 0.0
    %1001 = vmatpush1.msra.mxu0 0.0
    %1002 = vmatprep.subr.mxu0 0.0
    %1003 = vmatpush1.msra.mxu0 0.0
    %1004 = vmatprep.subr.mxu0 0.0
    %1005 = vmatpush1.msra.mxu0 0.0
    %1006 = vmatprep.subr.mxu0 0.0
    %1007 = vmatpush1.msra.mxu0 0.0
    %1008 = vmatprep.subr.mxu0 0.0
    %1009 = vmatpush1.msra.mxu0 0.0
    %1010 = vmatprep.subr.mxu0 0.0
    %1011 = vmatpush1.msra.mxu0 0.0
    %1012 = vmatprep.mubr.f32.mxu0 0.0
    %1013 = vmatmul.mubr.f32.gmra.mrb[0].mxu0 %v946
    %v1014 = vpop.f32.mrb[0].mxu0
    %v1015 = vadd.f32 0.0, %v1014
    %v1016 = vpop.f32.mrb[0].mxu0
    %1017 = vdwg.mxu0
    %v1018 = vadd.f32 %v314, %v940
    %v1019 = vxor.u32 %v1018, 2147483648
    %v1020 = vmul.f32 %v1019, 1.442695
    %v1021 = vpow.pop %v1020
    %v1022 = vadd.f32 %v1021, 1.0
    %v1023 = vrcp.pop %v1022
    %v1024 = vmul.f32 1.0, %v1023
    %v1025 = vtanh.pop %v1018
    %v1026 = vmul.f32 %v1024, %v766
    %1028 = vrot.lane.b32.xlu0 %v1025, 64
    %v1029 = vpop.permute.xlu0 %1028
    %v1031 = vmul.f32 %v1024, %v1029
    %1033 = vrot.lane.b32.xlu0 %v1031, 32
    %v1034 = vpop.permute.xlu0 %1033
    %v1036 = vadd.f32 %v1026, %v1034
    %v1037 = vtanh.pop %v1036
    %1039 = vrot.lane.b32.xlu0 %v1037, 64
    %v1040 = vpop.permute.xlu0 %1039
    %v1042 = vmul.f32 %v1024, %v1040
    %1044 = vrot.lane.b32.xlu0 %v1042, 32
    %v1045 = vpop.permute.xlu0 %1044
    %v1046 = vsel %vm506, %v1045, 0
    %1048 = vmatprep.subr.mxu0 0.0
    %1049 = vmatpush1.msra.mxu0 %v468
    %1050 = vmatprep.subr.mxu0 0.0
    %1051 = vmatpush1.msra.mxu0 %v469
    %1052 = vmatprep.subr.mxu0 0.0
    %1053 = vmatpush1.msra.mxu0 %v470
    %1054 = vmatprep.subr.mxu0 0.0
    %1055 = vmatpush1.msra.mxu0 %v471
    %1056 = vmatprep.subr.mxu0 0.0
    %1057 = vmatpush1.msra.mxu0 0.0
    %1058 = vmatprep.subr.mxu0 0.0
    %1059 = vmatpush1.msra.mxu0 0.0
    %1060 = vmatprep.subr.mxu0 0.0
    %1061 = vmatpush1.msra.mxu0 0.0
    %1062 = vmatprep.subr.mxu0 0.0
    %1063 = vmatpush1.msra.mxu0 0.0
    %1064 = vmatprep.subr.mxu0 0.0
    %1065 = vmatpush1.msra.mxu0 0.0
    %1066 = vmatprep.subr.mxu0 0.0
    %1067 = vmatpush1.msra.mxu0 0.0
    %1068 = vmatprep.subr.mxu0 0.0
    %1069 = vmatpush1.msra.mxu0 0.0
    %1070 = vmatprep.subr.mxu0 0.0
    %1071 = vmatpush1.msra.mxu0 0.0
    %1072 = vmatprep.subr.mxu0 0.0
    %1073 = vmatpush1.msra.mxu0 0.0
    %1074 = vmatprep.subr.mxu0 0.0
    %1075 = vmatpush1.msra.mxu0 0.0
    %1076 = vmatprep.subr.mxu0 0.0
    %1077 = vmatpush1.msra.mxu0 0.0
    %1078 = vmatprep.subr.mxu0 0.0
    %1079 = vmatpush1.msra.mxu0 0.0
    %1080 = vmatprep.subr.mxu0 0.0
    %1081 = vmatpush1.msra.mxu0 0.0
    %1082 = vmatprep.subr.mxu0 0.0
    %1083 = vmatpush1.msra.mxu0 0.0
    %1084 = vmatprep.subr.mxu0 0.0
    %1085 = vmatpush1.msra.mxu0 0.0
    %1086 = vmatprep.subr.mxu0 0.0
    %1087 = vmatpush1.msra.mxu0 0.0
    %1088 = vmatprep.subr.mxu0 0.0
    %1089 = vmatpush1.msra.mxu0 0.0
    %1090 = vmatprep.subr.mxu0 0.0
    %1091 = vmatpush1.msra.mxu0 0.0
    %1092 = vmatprep.subr.mxu0 0.0
    %1093 = vmatpush1.msra.mxu0 0.0
    %1094 = vmatprep.subr.mxu0 0.0
    %1095 = vmatpush1.msra.mxu0 0.0
    %1096 = vmatprep.subr.mxu0 0.0
    %1097 = vmatpush1.msra.mxu0 0.0
    %1098 = vmatprep.subr.mxu0 0.0
    %1099 = vmatpush1.msra.mxu0 0.0
    %1100 = vmatprep.subr.mxu0 0.0
    %1101 = vmatpush1.msra.mxu0 0.0
    %1102 = vmatprep.subr.mxu0 0.0
    %1103 = vmatpush1.msra.mxu0 0.0
    %1104 = vmatprep.subr.mxu0 0.0
    %1105 = vmatpush1.msra.mxu0 0.0
    %1106 = vmatprep.subr.mxu0 0.0
    %1107 = vmatpush1.msra.mxu0 0.0
    %1108 = vmatprep.subr.mxu0 0.0
    %1109 = vmatpush1.msra.mxu0 0.0
    %1110 = vmatprep.subr.mxu0 0.0
    %1111 = vmatpush1.msra.mxu0 0.0
    %1112 = vmatprep.mubr.f32.mxu0 0.0
    %1113 = vmatmul.mubr.f32.gmra.mrb[0].mxu0 %v1046
    %v1114 = vpop.f32.mrb[0].mxu0
    %v1115 = vadd.f32 %v501, %v1114
    %v1116 = vpop.f32.mrb[0].mxu0
    %1117 = vdwg.mxu0
    %v1118 = vadd.f32 %v1115, %v1015
    %v1119 = vxor.u32 %v1118, 2147483648
    %v1120 = vmul.f32 %v1119, 1.442695
    %v1121 = vpow.pop %v1120
    %v1122 = vadd.f32 %v1121, 1.0
    %v1123 = vrcp.pop %v1122
    %v1124 = vmul.f32 1.0, %v1123
    %v1125 = vtanh.pop %v1118
    %v1126 = vmul.f32 %v1124, %v866
    %1128 = vrot.lane.b32.xlu0 %v1125, 64
    %v1129 = vpop.permute.xlu0 %1128
    %v1131 = vmul.f32 %v1124, %v1129
    %1133 = vrot.lane.b32.xlu0 %v1131, 32
    %v1134 = vpop.permute.xlu0 %1133
    %v1136 = vadd.f32 %v1126, %v1134
    %v1137 = vtanh.pop %v1136
    %1139 = vrot.lane.b32.xlu0 %v1137, 64
    %v1140 = vpop.permute.xlu0 %1139
    %v1142 = vmul.f32 %v1124, %v1140
    %1143 = vmatprep.subr.mxu0 0.0
    %1144 = vmatpush1.msra.mxu0 %v460
    %1145 = vmatprep.subr.mxu0 0.0
    %1146 = vmatpush1.msra.mxu0 %v461
    %1147 = vmatprep.subr.mxu0 0.0
    %1148 = vmatpush1.msra.mxu0 %v462
    %1149 = vmatprep.subr.mxu0 0.0
    %1150 = vmatpush1.msra.mxu0 %v463
    %1151 = vmatprep.subr.mxu0 0.0
    %1152 = vmatpush1.msra.mxu0 0.0
    %1153 = vmatprep.subr.mxu0 0.0
    %1154 = vmatpush1.msra.mxu0 0.0
    %1155 = vmatprep.subr.mxu0 0.0
    %1156 = vmatpush1.msra.mxu0 0.0
    %1157 = vmatprep.subr.mxu0 0.0
    %1158 = vmatpush1.msra.mxu0 0.0
    %1159 = vmatprep.subr.mxu0 0.0
    %1160 = vmatpush1.msra.mxu0 0.0
    %1161 = vmatprep.subr.mxu0 0.0
    %1162 = vmatpush1.msra.mxu0 0.0
    %1163 = vmatprep.subr.mxu0 0.0
    %1164 = vmatpush1.msra.mxu0 0.0
    %1165 = vmatprep.subr.mxu0 0.0
    %1166 = vmatpush1.msra.mxu0 0.0
    %1167 = vmatprep.subr.mxu0 0.0
    %1168 = vmatpush1.msra.mxu0 0.0
    %1169 = vmatprep.subr.mxu0 0.0
    %1170 = vmatpush1.msra.mxu0 0.0
    %1171 = vmatprep.subr.mxu0 0.0
    %1172 = vmatpush1.msra.mxu0 0.0
    %1173 = vmatprep.subr.mxu0 0.0
    %1174 = vmatpush1.msra.mxu0 0.0
    %1175 = vmatprep.subr.mxu0 0.0
    %1176 = vmatpush1.msra.mxu0 0.0
    %1177 = vmatprep.subr.mxu0 0.0
    %1178 = vmatpush1.msra.mxu0 0.0
    %1179 = vmatprep.subr.mxu0 0.0
    %1180 = vmatpush1.msra.mxu0 0.0
    %1181 = vmatprep.subr.mxu0 0.0
    %1182 = vmatpush1.msra.mxu0 0.0
    %1183 = vmatprep.subr.mxu0 0.0
    %1184 = vmatpush1.msra.mxu0 0.0
    %1185 = vmatprep.subr.mxu0 0.0
    %1186 = vmatpush1.msra.mxu0 0.0
    %1187 = vmatprep.subr.mxu0 0.0
    %1188 = vmatpush1.msra.mxu0 0.0
    %1189 = vmatprep.subr.mxu0 0.0
    %1190 = vmatpush1.msra.mxu0 0.0
    %1191 = vmatprep.subr.mxu0 0.0
    %1192 = vmatpush1.msra.mxu0 0.0
    %1193 = vmatprep.subr.mxu0 0.0
    %1194 = vmatpush1.msra.mxu0 0.0
    %1195 = vmatprep.subr.mxu0 0.0
    %1196 = vmatpush1.msra.mxu0 0.0
    %1197 = vmatprep.subr.mxu0 0.0
    %1198 = vmatpush1.msra.mxu0 0.0
    %1199 = vmatprep.subr.mxu0 0.0
    %1200 = vmatpush1.msra.mxu0 0.0
    %1201 = vmatprep.subr.mxu0 0.0
    %1202 = vmatpush1.msra.mxu0 0.0
    %1203 = vmatprep.subr.mxu0 0.0
    %1204 = vmatpush1.msra.mxu0 0.0
    %1205 = vmatprep.subr.mxu0 0.0
    %1206 = vmatpush1.msra.mxu0 0.0
    %1207 = vmatprep.mubr.f32.mxu0 0.0
    %1208 = vmatmul.mubr.f32.gmra.mrb[0].mxu0 %v1046
    %v1209 = vpop.f32.mrb[0].mxu0
    %v1210 = vadd.f32 0.0, %v1209
    %v1211 = vpop.f32.mrb[0].mxu0
    %1212 = vdwg.mxu0
    %1214 = vrot.lane.b32.xlu0 %v1142, 32
    %v1215 = vpop.permute.xlu0 %1214
    %v1216 = vsel %vm506, %v1215, 0
    %1218 = vmatprep.subr.mxu0 0.0
    %1219 = vmatpush1.msra.mxu0 %v464
    %1220 = vmatprep.subr.mxu0 0.0
    %1221 = vmatpush1.msra.mxu0 %v465
    %1222 = vmatprep.subr.mxu0 0.0
    %1223 = vmatpush1.msra.mxu0 %v466
    %1224 = vmatprep.subr.mxu0 0.0
    %1225 = vmatpush1.msra.mxu0 %v467
    %1226 = vmatprep.subr.mxu0 0.0
    %1227 = vmatpush1.msra.mxu0 0.0
    %1228 = vmatprep.subr.mxu0 0.0
    %1229 = vmatpush1.msra.mxu0 0.0
    %1230 = vmatprep.subr.mxu0 0.0
    %1231 = vmatpush1.msra.mxu0 0.0
    %1232 = vmatprep.subr.mxu0 0.0
    %1233 = vmatpush1.msra.mxu0 0.0
    %1234 = vmatprep.subr.mxu0 0.0
    %1235 = vmatpush1.msra.mxu0 0.0
    %1236 = vmatprep.subr.mxu0 0.0
    %1237 = vmatpush1.msra.mxu0 0.0
    %1238 = vmatprep.subr.mxu0 0.0
    %1239 = vmatpush1.msra.mxu0 0.0
    %1240 = vmatprep.subr.mxu0 0.0
    %1241 = vmatpush1.msra.mxu0 0.0
    %1242 = vmatprep.subr.mxu0 0.0
    %1243 = vmatpush1.msra.mxu0 0.0
    %1244 = vmatprep.subr.mxu0 0.0
    %1245 = vmatpush1.msra.mxu0 0.0
    %1246 = vmatprep.subr.mxu0 0.0
    %1247 = vmatpush1.msra.mxu0 0.0
    %1248 = vmatprep.subr.mxu0 0.0
    %1249 = vmatpush1.msra.mxu0 0.0
    %1250 = vmatprep.subr.mxu0 0.0
    %1251 = vmatpush1.msra.mxu0 0.0
    %1252 = vmatprep.subr.mxu0 0.0
    %1253 = vmatpush1.msra.mxu0 0.0
    %1254 = vmatprep.subr.mxu0 0.0
    %1255 = vmatpush1.msra.mxu0 0.0
    %1256 = vmatprep.subr.mxu0 0.0
    %1257 = vmatpush1.msra.mxu0 0.0
    %1258 = vmatprep.subr.mxu0 0.0
    %1259 = vmatpush1.msra.mxu0 0.0
    %1260 = vmatprep.subr.mxu0 0.0
    %1261 = vmatpush1.msra.mxu0 0.0
    %1262 = vmatprep.subr.mxu0 0.0
    %1263 = vmatpush1.msra.mxu0 0.0
    %1264 = vmatprep.subr.mxu0 0.0
    %1265 = vmatpush1.msra.mxu0 0.0
    %1266 = vmatprep.subr.mxu0 0.0
    %1267 = vmatpush1.msra.mxu0 0.0
    %1268 = vmatprep.subr.mxu0 0.0
    %1269 = vmatpush1.msra.mxu0 0.0
    %1270 = vmatprep.subr.mxu0 0.0
    %1271 = vmatpush1.msra.mxu0 0.0
    %1272 = vmatprep.subr.mxu0 0.0
    %1273 = vmatpush1.msra.mxu0 0.0
    %1274 = vmatprep.subr.mxu0 0.0
    %1275 = vmatpush1.msra.mxu0 0.0
    %1276 = vmatprep.subr.mxu0 0.0
    %1277 = vmatpush1.msra.mxu0 0.0
    %1278 = vmatprep.subr.mxu0 0.0
    %1279 = vmatpush1.msra.mxu0 0.0
    %1280 = vmatprep.subr.mxu0 0.0
    %1281 = vmatpush1.msra.mxu0 0.0
    %1282 = vmatprep.mubr.f32.mxu0 0.0
    %1283 = vmatmul.mubr.f32.gmra.mrb[0].mxu0 %v1216
    %v1284 = vpop.f32.mrb[0].mxu0
    %v1285 = vadd.f32 0.0, %v1284
    %v1286 = vpop.f32.mrb[0].mxu0
    %1287 = vdwg.mxu0
    %v1288 = vadd.f32 %v316, %v1210
    %v1289 = vxor.u32 %v1288, 2147483648
    %v1290 = vmul.f32 %v1289, 1.442695
    %v1291 = vpow.pop %v1290
    %v1292 = vadd.f32 %v1291, 1.0
    %v1293 = vrcp.pop %v1292
    %v1294 = vmul.f32 1.0, %v1293
    %v1295 = vtanh.pop %v1288
    %v1296 = vmul.f32 %v1294, %v1036
    %1298 = vrot.lane.b32.xlu0 %v1295, 64
    %v1299 = vpop.permute.xlu0 %1298
    %v1301 = vmul.f32 %v1294, %v1299
    %1303 = vrot.lane.b32.xlu0 %v1301, 32
    %v1304 = vpop.permute.xlu0 %1303
    %v1306 = vadd.f32 %v1296, %v1304
    %v1307 = vtanh.pop %v1306
    %1309 = vrot.lane.b32.xlu0 %v1307, 64
    %v1310 = vpop.permute.xlu0 %1309
    %v1312 = vmul.f32 %v1294, %v1310
    %1314 = vrot.lane.b32.xlu0 %v1312, 32
    %v1315 = vpop.permute.xlu0 %1314
    %v1316 = vsel %vm506, %v1315, 0
    %1318 = vmatprep.subr.mxu0 0.0
    %1319 = vmatpush1.msra.mxu0 %v468
    %1320 = vmatprep.subr.mxu0 0.0
    %1321 = vmatpush1.msra.mxu0 %v469
    %1322 = vmatprep.subr.mxu0 0.0
    %1323 = vmatpush1.msra.mxu0 %v470
    %1324 = vmatprep.subr.mxu0 0.0
    %1325 = vmatpush1.msra.mxu0 %v471
    %1326 = vmatprep.subr.mxu0 0.0
    %1327 = vmatpush1.msra.mxu0 0.0
    %1328 = vmatprep.subr.mxu0 0.0
    %1329 = vmatpush1.msra.mxu0 0.0
    %1330 = vmatprep.subr.mxu0 0.0
    %1331 = vmatpush1.msra.mxu0 0.0
    %1332 = vmatprep.subr.mxu0 0.0
    %1333 = vmatpush1.msra.mxu0 0.0
    %1334 = vmatprep.subr.mxu0 0.0
    %1335 = vmatpush1.msra.mxu0 0.0
    %1336 = vmatprep.subr.mxu0 0.0
    %1337 = vmatpush1.msra.mxu0 0.0
    %1338 = vmatprep.subr.mxu0 0.0
    %1339 = vmatpush1.msra.mxu0 0.0
    %1340 = vmatprep.subr.mxu0 0.0
    %1341 = vmatpush1.msra.mxu0 0.0
    %1342 = vmatprep.subr.mxu0 0.0
    %1343 = vmatpush1.msra.mxu0 0.0
    %1344 = vmatprep.subr.mxu0 0.0
    %1345 = vmatpush1.msra.mxu0 0.0
    %1346 = vmatprep.subr.mxu0 0.0
    %1347 = vmatpush1.msra.mxu0 0.0
    %1348 = vmatprep.subr.mxu0 0.0
    %1349 = vmatpush1.msra.mxu0 0.0
    %1350 = vmatprep.subr.mxu0 0.0
    %1351 = vmatpush1.msra.mxu0 0.0
    %1352 = vmatprep.subr.mxu0 0.0
    %1353 = vmatpush1.msra.mxu0 0.0
    %1354 = vmatprep.subr.mxu0 0.0
    %1355 = vmatpush1.msra.mxu0 0.0
    %1356 = vmatprep.subr.mxu0 0.0
    %1357 = vmatpush1.msra.mxu0 0.0
    %1358 = vmatprep.subr.mxu0 0.0
    %1359 = vmatpush1.msra.mxu0 0.0
    %1360 = vmatprep.subr.mxu0 0.0
    %1361 = vmatpush1.msra.mxu0 0.0
    %1362 = vmatprep.subr.mxu0 0.0
    %1363 = vmatpush1.msra.mxu0 0.0
    %1364 = vmatprep.subr.mxu0 0.0
    %1365 = vmatpush1.msra.mxu0 0.0
    %1366 = vmatprep.subr.mxu0 0.0
    %1367 = vmatpush1.msra.mxu0 0.0
    %1368 = vmatprep.subr.mxu0 0.0
    %1369 = vmatpush1.msra.mxu0 0.0
    %1370 = vmatprep.subr.mxu0 0.0
    %1371 = vmatpush1.msra.mxu0 0.0
    %1372 = vmatprep.subr.mxu0 0.0
    %1373 = vmatpush1.msra.mxu0 0.0
    %1374 = vmatprep.subr.mxu0 0.0
    %1375 = vmatpush1.msra.mxu0 0.0
    %1376 = vmatprep.subr.mxu0 0.0
    %1377 = vmatpush1.msra.mxu0 0.0
    %1378 = vmatprep.subr.mxu0 0.0
    %1379 = vmatpush1.msra.mxu0 0.0
    %1380 = vmatprep.subr.mxu0 0.0
    %1381 = vmatpush1.msra.mxu0 0.0
    %1382 = vmatprep.mubr.f32.mxu0 0.0
    %1383 = vmatmul.mubr.f32.gmra.mrb[0].mxu0 %v1316
    %v1384 = vpop.f32.mrb[0].mxu0
    %v1385 = vadd.f32 %v501, %v1384
    %v1386 = vpop.f32.mrb[0].mxu0
    %1387 = vdwg.mxu0
    %v1388 = vadd.f32 %v1385, %v1285
    %v1389 = vxor.u32 %v1388, 2147483648
    %v1390 = vmul.f32 %v1389, 1.442695
    %v1391 = vpow.pop %v1390
    %v1392 = vadd.f32 %v1391, 1.0
    %v1393 = vrcp.pop %v1392
    %v1394 = vmul.f32 1.0, %v1393
    %v1395 = vtanh.pop %v1388
    %v1396 = vmul.f32 %v1394, %v1136
    %1398 = vrot.lane.b32.xlu0 %v1395, 64
    %v1399 = vpop.permute.xlu0 %1398
    %v1401 = vmul.f32 %v1394, %v1399
    %1403 = vrot.lane.b32.xlu0 %v1401, 32
    %v1404 = vpop.permute.xlu0 %1403
    %v1406 = vadd.f32 %v1396, %v1404
    %v1407 = vtanh.pop %v1406
    %1409 = vrot.lane.b32.xlu0 %v1407, 64
    %v1410 = vpop.permute.xlu0 %1409
    %v1412 = vmul.f32 %v1394, %v1410
    %1413 = vmatprep.subr.mxu0 0.0
    %1414 = vmatpush1.msra.mxu0 %v460
    %1415 = vmatprep.subr.mxu0 0.0
    %1416 = vmatpush1.msra.mxu0 %v461
    %1417 = vmatprep.subr.mxu0 0.0
    %1418 = vmatpush1.msra.mxu0 %v462
    %1419 = vmatprep.subr.mxu0 0.0
    %1420 = vmatpush1.msra.mxu0 %v463
    %1421 = vmatprep.subr.mxu0 0.0
    %1422 = vmatpush1.msra.mxu0 0.0
    %1423 = vmatprep.subr.mxu0 0.0
    %1424 = vmatpush1.msra.mxu0 0.0
    %1425 = vmatprep.subr.mxu0 0.0
    %1426 = vmatpush1.msra.mxu0 0.0
    %1427 = vmatprep.subr.mxu0 0.0
    %1428 = vmatpush1.msra.mxu0 0.0
    %1429 = vmatprep.subr.mxu0 0.0
    %1430 = vmatpush1.msra.mxu0 0.0
    %1431 = vmatprep.subr.mxu0 0.0
    %1432 = vmatpush1.msra.mxu0 0.0
    %1433 = vmatprep.subr.mxu0 0.0
    %1434 = vmatpush1.msra.mxu0 0.0
    %1435 = vmatprep.subr.mxu0 0.0
    %1436 = vmatpush1.msra.mxu0 0.0
    %1437 = vmatprep.subr.mxu0 0.0
    %1438 = vmatpush1.msra.mxu0 0.0
    %1439 = vmatprep.subr.mxu0 0.0
    %1440 = vmatpush1.msra.mxu0 0.0
    %1441 = vmatprep.subr.mxu0 0.0
    %1442 = vmatpush1.msra.mxu0 0.0
    %1443 = vmatprep.subr.mxu0 0.0
    %1444 = vmatpush1.msra.mxu0 0.0
    %1445 = vmatprep.subr.mxu0 0.0
    %1446 = vmatpush1.msra.mxu0 0.0
    %1447 = vmatprep.subr.mxu0 0.0
    %1448 = vmatpush1.msra.mxu0 0.0
    %1449 = vmatprep.subr.mxu0 0.0
    %1450 = vmatpush1.msra.mxu0 0.0
    %1451 = vmatprep.subr.mxu0 0.0
    %1452 = vmatpush1.msra.mxu0 0.0
    %1453 = vmatprep.subr.mxu0 0.0
    %1454 = vmatpush1.msra.mxu0 0.0
    %1455 = vmatprep.subr.mxu0 0.0
    %1456 = vmatpush1.msra.mxu0 0.0
    %1457 = vmatprep.subr.mxu0 0.0
    %1458 = vmatpush1.msra.mxu0 0.0
    %1459 = vmatprep.subr.mxu0 0.0
    %1460 = vmatpush1.msra.mxu0 0.0
    %1461 = vmatprep.subr.mxu0 0.0
    %1462 = vmatpush1.msra.mxu0 0.0
    %1463 = vmatprep.subr.mxu0 0.0
    %1464 = vmatpush1.msra.mxu0 0.0
    %1465 = vmatprep.subr.mxu0 0.0
    %1466 = vmatpush1.msra.mxu0 0.0
    %1467 = vmatprep.subr.mxu0 0.0
    %1468 = vmatpush1.msra.mxu0 0.0
    %1469 = vmatprep.subr.mxu0 0.0
    %1470 = vmatpush1.msra.mxu0 0.0
    %1471 = vmatprep.subr.mxu0 0.0
    %1472 = vmatpush1.msra.mxu0 0.0
    %1473 = vmatprep.subr.mxu0 0.0
    %1474 = vmatpush1.msra.mxu0 0.0
    %1475 = vmatprep.subr.mxu0 0.0
    %1476 = vmatpush1.msra.mxu0 0.0
    %1477 = vmatprep.mubr.f32.mxu0 0.0
    %1478 = vmatmul.mubr.f32.gmra.mrb[0].mxu0 %v1316
    %v1479 = vpop.f32.mrb[0].mxu0
    %v1480 = vadd.f32 0.0, %v1479
    %v1481 = vpop.f32.mrb[0].mxu0
    %1482 = vdwg.mxu0
    %1484 = vrot.lane.b32.xlu0 %v1412, 32
    %v1485 = vpop.permute.xlu0 %1484
    %v1486 = vsel %vm506, %v1485, 0
    %1488 = vmatprep.subr.mxu0 0.0
    %1489 = vmatpush1.msra.mxu0 %v464
    %1490 = vmatprep.subr.mxu0 0.0
    %1491 = vmatpush1.msra.mxu0 %v465
    %1492 = vmatprep.subr.mxu0 0.0
    %1493 = vmatpush1.msra.mxu0 %v466
    %1494 = vmatprep.subr.mxu0 0.0
    %1495 = vmatpush1.msra.mxu0 %v467
    %1496 = vmatprep.subr.mxu0 0.0
    %1497 = vmatpush1.msra.mxu0 0.0
    %1498 = vmatprep.subr.mxu0 0.0
    %1499 = vmatpush1.msra.mxu0 0.0
    %1500 = vmatprep.subr.mxu0 0.0
    %1501 = vmatpush1.msra.mxu0 0.0
    %1502 = vmatprep.subr.mxu0 0.0
    %1503 = vmatpush1.msra.mxu0 0.0
    %1504 = vmatprep.subr.mxu0 0.0
    %1505 = vmatpush1.msra.mxu0 0.0
    %1506 = vmatprep.subr.mxu0 0.0
    %1507 = vmatpush1.msra.mxu0 0.0
    %1508 = vmatprep.subr.mxu0 0.0
    %1509 = vmatpush1.msra.mxu0 0.0
    %1510 = vmatprep.subr.mxu0 0.0
    %1511 = vmatpush1.msra.mxu0 0.0
    %1512 = vmatprep.subr.mxu0 0.0
    %1513 = vmatpush1.msra.mxu0 0.0
    %1514 = vmatprep.subr.mxu0 0.0
    %1515 = vmatpush1.msra.mxu0 0.0
    %1516 = vmatprep.subr.mxu0 0.0
    %1517 = vmatpush1.msra.mxu0 0.0
    %1518 = vmatprep.subr.mxu0 0.0
    %1519 = vmatpush1.msra.mxu0 0.0
    %1520 = vmatprep.subr.mxu0 0.0
    %1521 = vmatpush1.msra.mxu0 0.0
    %1522 = vmatprep.subr.mxu0 0.0
    %1523 = vmatpush1.msra.mxu0 0.0
    %1524 = vmatprep.subr.mxu0 0.0
    %1525 = vmatpush1.msra.mxu0 0.0
    %1526 = vmatprep.subr.mxu0 0.0
    %1527 = vmatpush1.msra.mxu0 0.0
    %1528 = vmatprep.subr.mxu0 0.0
    %1529 = vmatpush1.msra.mxu0 0.0
    %1530 = vmatprep.subr.mxu0 0.0
    %1531 = vmatpush1.msra.mxu0 0.0
    %1532 = vmatprep.subr.mxu0 0.0
    %1533 = vmatpush1.msra.mxu0 0.0
    %1534 = vmatprep.subr.mxu0 0.0
    %1535 = vmatpush1.msra.mxu0 0.0
    %1536 = vmatprep.subr.mxu0 0.0
    %1537 = vmatpush1.msra.mxu0 0.0
    %1538 = vmatprep.subr.mxu0 0.0
    %1539 = vmatpush1.msra.mxu0 0.0
    %1540 = vmatprep.subr.mxu0 0.0
    %1541 = vmatpush1.msra.mxu0 0.0
    %1542 = vmatprep.subr.mxu0 0.0
    %1543 = vmatpush1.msra.mxu0 0.0
    %1544 = vmatprep.subr.mxu0 0.0
    %1545 = vmatpush1.msra.mxu0 0.0
    %1546 = vmatprep.subr.mxu0 0.0
    %1547 = vmatpush1.msra.mxu0 0.0
    %1548 = vmatprep.subr.mxu0 0.0
    %1549 = vmatpush1.msra.mxu0 0.0
    %1550 = vmatprep.subr.mxu0 0.0
    %1551 = vmatpush1.msra.mxu0 0.0
    %1552 = vmatprep.mubr.f32.mxu0 0.0
    %1553 = vmatmul.mubr.f32.gmra.mrb[0].mxu0 %v1486
    %v1554 = vpop.f32.mrb[0].mxu0
    %v1555 = vadd.f32 0.0, %v1554
    %v1556 = vpop.f32.mrb[0].mxu0
    %1557 = vdwg.mxu0
    %v1558 = vadd.f32 %v385, %v1480
    %v1559 = vxor.u32 %v1558, 2147483648
    %v1560 = vmul.f32 %v1559, 1.442695
    %v1561 = vpow.pop %v1560
    %v1562 = vadd.f32 %v1561, 1.0
    %v1563 = vrcp.pop %v1562
    %v1564 = vmul.f32 1.0, %v1563
    %v1565 = vtanh.pop %v1558
    %v1566 = vmul.f32 %v1564, %v1306
    %1568 = vrot.lane.b32.xlu0 %v1565, 64
    %v1569 = vpop.permute.xlu0 %1568
    %v1571 = vmul.f32 %v1564, %v1569
    %1573 = vrot.lane.b32.xlu0 %v1571, 32
    %v1574 = vpop.permute.xlu0 %1573
    %v1576 = vadd.f32 %v1566, %v1574
    %v1577 = vtanh.pop %v1576
    %1579 = vrot.lane.b32.xlu0 %v1577, 64
    %v1580 = vpop.permute.xlu0 %1579
    %v1582 = vmul.f32 %v1564, %v1580
    %1584 = vrot.lane.b32.xlu0 %v1582, 32
    %v1585 = vpop.permute.xlu0 %1584
    %v1586 = vsel %vm506, %v1585, 0
    %1588 = vmatprep.subr.mxu0 0.0
    %1589 = vmatpush1.msra.mxu0 %v468
    %1590 = vmatprep.subr.mxu0 0.0
    %1591 = vmatpush1.msra.mxu0 %v469
    %1592 = vmatprep.subr.mxu0 0.0
    %1593 = vmatpush1.msra.mxu0 %v470
    %1594 = vmatprep.subr.mxu0 0.0
    %1595 = vmatpush1.msra.mxu0 %v471
    %1596 = vmatprep.subr.mxu0 0.0
    %1597 = vmatpush1.msra.mxu0 0.0
    %1598 = vmatprep.subr.mxu0 0.0
    %1599 = vmatpush1.msra.mxu0 0.0
    %1600 = vmatprep.subr.mxu0 0.0
    %1601 = vmatpush1.msra.mxu0 0.0
    %1602 = vmatprep.subr.mxu0 0.0
    %1603 = vmatpush1.msra.mxu0 0.0
    %1604 = vmatprep.subr.mxu0 0.0
    %1605 = vmatpush1.msra.mxu0 0.0
    %1606 = vmatprep.subr.mxu0 0.0
    %1607 = vmatpush1.msra.mxu0 0.0
    %1608 = vmatprep.subr.mxu0 0.0
    %1609 = vmatpush1.msra.mxu0 0.0
    %1610 = vmatprep.subr.mxu0 0.0
    %1611 = vmatpush1.msra.mxu0 0.0
    %1612 = vmatprep.subr.mxu0 0.0
    %1613 = vmatpush1.msra.mxu0 0.0
    %1614 = vmatprep.subr.mxu0 0.0
    %1615 = vmatpush1.msra.mxu0 0.0
    %1616 = vmatprep.subr.mxu0 0.0
    %1617 = vmatpush1.msra.mxu0 0.0
    %1618 = vmatprep.subr.mxu0 0.0
    %1619 = vmatpush1.msra.mxu0 0.0
    %1620 = vmatprep.subr.mxu0 0.0
    %1621 = vmatpush1.msra.mxu0 0.0
    %1622 = vmatprep.subr.mxu0 0.0
    %1623 = vmatpush1.msra.mxu0 0.0
    %1624 = vmatprep.subr.mxu0 0.0
    %1625 = vmatpush1.msra.mxu0 0.0
    %1626 = vmatprep.subr.mxu0 0.0
    %1627 = vmatpush1.msra.mxu0 0.0
    %1628 = vmatprep.subr.mxu0 0.0
    %1629 = vmatpush1.msra.mxu0 0.0
    %1630 = vmatprep.subr.mxu0 0.0
    %1631 = vmatpush1.msra.mxu0 0.0
    %1632 = vmatprep.subr.mxu0 0.0
    %1633 = vmatpush1.msra.mxu0 0.0
    %1634 = vmatprep.subr.mxu0 0.0
    %1635 = vmatpush1.msra.mxu0 0.0
    %1636 = vmatprep.subr.mxu0 0.0
    %1637 = vmatpush1.msra.mxu0 0.0
    %1638 = vmatprep.subr.mxu0 0.0
    %1639 = vmatpush1.msra.mxu0 0.0
    %1640 = vmatprep.subr.mxu0 0.0
    %1641 = vmatpush1.msra.mxu0 0.0
    %1642 = vmatprep.subr.mxu0 0.0
    %1643 = vmatpush1.msra.mxu0 0.0
    %1644 = vmatprep.subr.mxu0 0.0
    %1645 = vmatpush1.msra.mxu0 0.0
    %1646 = vmatprep.subr.mxu0 0.0
    %1647 = vmatpush1.msra.mxu0 0.0
    %1648 = vmatprep.subr.mxu0 0.0
    %1649 = vmatpush1.msra.mxu0 0.0
    %1650 = vmatprep.subr.mxu0 0.0
    %1651 = vmatpush1.msra.mxu0 0.0
    %1652 = vmatprep.mubr.f32.mxu0 0.0
    %1653 = vmatmul.mubr.f32.gmra.mrb[0].mxu0 %v1586
    %v1654 = vpop.f32.mrb[0].mxu0
    %v1655 = vadd.f32 %v501, %v1654
    %v1656 = vpop.f32.mrb[0].mxu0
    %1657 = vdwg.mxu0
    %v1658 = vadd.f32 %v1655, %v1555
    %v1659 = vxor.u32 %v1658, 2147483648
    %v1660 = vmul.f32 %v1659, 1.442695
    %v1661 = vpow.pop %v1660
    %v1662 = vadd.f32 %v1661, 1.0
    %v1663 = vrcp.pop %v1662
    %v1664 = vmul.f32 1.0, %v1663
    %v1665 = vtanh.pop %v1658
    %v1666 = vmul.f32 %v1664, %v1406
    %1668 = vrot.lane.b32.xlu0 %v1665, 64
    %v1669 = vpop.permute.xlu0 %1668
    %v1671 = vmul.f32 %v1664, %v1669
    %1673 = vrot.lane.b32.xlu0 %v1671, 32
    %v1674 = vpop.permute.xlu0 %1673
    %v1676 = vadd.f32 %v1666, %v1674
    %v1677 = vtanh.pop %v1676
    %1679 = vrot.lane.b32.xlu0 %v1677, 64
    %v1680 = vpop.permute.xlu0 %1679
    %v1682 = vmul.f32 %v1664, %v1680
    %1683 = vmatprep.subr.mxu0 0.0
    %1684 = vmatpush1.msra.mxu0 %v460
    %1685 = vmatprep.subr.mxu0 0.0
    %1686 = vmatpush1.msra.mxu0 %v461
    %1687 = vmatprep.subr.mxu0 0.0
    %1688 = vmatpush1.msra.mxu0 %v462
    %1689 = vmatprep.subr.mxu0 0.0
    %1690 = vmatpush1.msra.mxu0 %v463
    %1691 = vmatprep.subr.mxu0 0.0
    %1692 = vmatpush1.msra.mxu0 0.0
    %1693 = vmatprep.subr.mxu0 0.0
    %1694 = vmatpush1.msra.mxu0 0.0
    %1695 = vmatprep.subr.mxu0 0.0
    %1696 = vmatpush1.msra.mxu0 0.0
    %1697 = vmatprep.subr.mxu0 0.0
    %1698 = vmatpush1.msra.mxu0 0.0
    %1699 = vmatprep.subr.mxu0 0.0
    %1700 = vmatpush1.msra.mxu0 0.0
    %1701 = vmatprep.subr.mxu0 0.0
    %1702 = vmatpush1.msra.mxu0 0.0
    %1703 = vmatprep.subr.mxu0 0.0
    %1704 = vmatpush1.msra.mxu0 0.0
    %1705 = vmatprep.subr.mxu0 0.0
    %1706 = vmatpush1.msra.mxu0 0.0
    %1707 = vmatprep.subr.mxu0 0.0
    %1708 = vmatpush1.msra.mxu0 0.0
    %1709 = vmatprep.subr.mxu0 0.0
    %1710 = vmatpush1.msra.mxu0 0.0
    %1711 = vmatprep.subr.mxu0 0.0
    %1712 = vmatpush1.msra.mxu0 0.0
    %1713 = vmatprep.subr.mxu0 0.0
    %1714 = vmatpush1.msra.mxu0 0.0
    %1715 = vmatprep.subr.mxu0 0.0
    %1716 = vmatpush1.msra.mxu0 0.0
    %1717 = vmatprep.subr.mxu0 0.0
    %1718 = vmatpush1.msra.mxu0 0.0
    %1719 = vmatprep.subr.mxu0 0.0
    %1720 = vmatpush1.msra.mxu0 0.0
    %1721 = vmatprep.subr.mxu0 0.0
    %1722 = vmatpush1.msra.mxu0 0.0
    %1723 = vmatprep.subr.mxu0 0.0
    %1724 = vmatpush1.msra.mxu0 0.0
    %1725 = vmatprep.subr.mxu0 0.0
    %1726 = vmatpush1.msra.mxu0 0.0
    %1727 = vmatprep.subr.mxu0 0.0
    %1728 = vmatpush1.msra.mxu0 0.0
    %1729 = vmatprep.subr.mxu0 0.0
    %1730 = vmatpush1.msra.mxu0 0.0
    %1731 = vmatprep.subr.mxu0 0.0
    %1732 = vmatpush1.msra.mxu0 0.0
    %1733 = vmatprep.subr.mxu0 0.0
    %1734 = vmatpush1.msra.mxu0 0.0
    %1735 = vmatprep.subr.mxu0 0.0
    %1736 = vmatpush1.msra.mxu0 0.0
    %1737 = vmatprep.subr.mxu0 0.0
    %1738 = vmatpush1.msra.mxu0 0.0
    %1739 = vmatprep.subr.mxu0 0.0
    %1740 = vmatpush1.msra.mxu0 0.0
    %1741 = vmatprep.subr.mxu0 0.0
    %1742 = vmatpush1.msra.mxu0 0.0
    %1743 = vmatprep.subr.mxu0 0.0
    %1744 = vmatpush1.msra.mxu0 0.0
    %1745 = vmatprep.subr.mxu0 0.0
    %1746 = vmatpush1.msra.mxu0 0.0
    %1747 = vmatprep.mubr.f32.mxu0 0.0
    %1748 = vmatmul.mubr.f32.gmra.mrb[0].mxu0 %v1586
    %v1749 = vpop.f32.mrb[0].mxu0
    %v1750 = vadd.f32 0.0, %v1749
    %v1751 = vpop.f32.mrb[0].mxu0
    %1752 = vdwg.mxu0
    %1754 = vrot.lane.b32.xlu0 %v1682, 32
    %v1755 = vpop.permute.xlu0 %1754
    %v1756 = vsel %vm506, %v1755, 0
    %1758 = vmatprep.subr.mxu0 0.0
    %1759 = vmatpush1.msra.mxu0 %v464
    %1760 = vmatprep.subr.mxu0 0.0
    %1761 = vmatpush1.msra.mxu0 %v465
    %1762 = vmatprep.subr.mxu0 0.0
    %1763 = vmatpush1.msra.mxu0 %v466
    %1764 = vmatprep.subr.mxu0 0.0
    %1765 = vmatpush1.msra.mxu0 %v467
    %1766 = vmatprep.subr.mxu0 0.0
    %1767 = vmatpush1.msra.mxu0 0.0
    %1768 = vmatprep.subr.mxu0 0.0
    %1769 = vmatpush1.msra.mxu0 0.0
    %1770 = vmatprep.subr.mxu0 0.0
    %1771 = vmatpush1.msra.mxu0 0.0
    %1772 = vmatprep.subr.mxu0 0.0
    %1773 = vmatpush1.msra.mxu0 0.0
    %1774 = vmatprep.subr.mxu0 0.0
    %1775 = vmatpush1.msra.mxu0 0.0
    %1776 = vmatprep.subr.mxu0 0.0
    %1777 = vmatpush1.msra.mxu0 0.0
    %1778 = vmatprep.subr.mxu0 0.0
    %1779 = vmatpush1.msra.mxu0 0.0
    %1780 = vmatprep.subr.mxu0 0.0
    %1781 = vmatpush1.msra.mxu0 0.0
    %1782 = vmatprep.subr.mxu0 0.0
    %1783 = vmatpush1.msra.mxu0 0.0
    %1784 = vmatprep.subr.mxu0 0.0
    %1785 = vmatpush1.msra.mxu0 0.0
    %1786 = vmatprep.subr.mxu0 0.0
    %1787 = vmatpush1.msra.mxu0 0.0
    %1788 = vmatprep.subr.mxu0 0.0
    %1789 = vmatpush1.msra.mxu0 0.0
    %1790 = vmatprep.subr.mxu0 0.0
    %1791 = vmatpush1.msra.mxu0 0.0
    %1792 = vmatprep.subr.mxu0 0.0
    %1793 = vmatpush1.msra.mxu0 0.0
    %1794 = vmatprep.subr.mxu0 0.0
    %1795 = vmatpush1.msra.mxu0 0.0
    %1796 = vmatprep.subr.mxu0 0.0
    %1797 = vmatpush1.msra.mxu0 0.0
    %1798 = vmatprep.subr.mxu0 0.0
    %1799 = vmatpush1.msra.mxu0 0.0
    %1800 = vmatprep.subr.mxu0 0.0
    %1801 = vmatpush1.msra.mxu0 0.0
    %1802 = vmatprep.subr.mxu0 0.0
    %1803 = vmatpush1.msra.mxu0 0.0
    %1804 = vmatprep.subr.mxu0 0.0
    %1805 = vmatpush1.msra.mxu0 0.0
    %1806 = vmatprep.subr.mxu0 0.0
    %1807 = vmatpush1.msra.mxu0 0.0
    %1808 = vmatprep.subr.mxu0 0.0
    %1809 = vmatpush1.msra.mxu0 0.0
    %1810 = vmatprep.subr.mxu0 0.0
    %1811 = vmatpush1.msra.mxu0 0.0
    %1812 = vmatprep.subr.mxu0 0.0
    %1813 = vmatpush1.msra.mxu0 0.0
    %1814 = vmatprep.subr.mxu0 0.0
    %1815 = vmatpush1.msra.mxu0 0.0
    %1816 = vmatprep.subr.mxu0 0.0
    %1817 = vmatpush1.msra.mxu0 0.0
    %1818 = vmatprep.subr.mxu0 0.0
    %1819 = vmatpush1.msra.mxu0 0.0
    %1820 = vmatprep.subr.mxu0 0.0
    %1821 = vmatpush1.msra.mxu0 0.0
    %1822 = vmatprep.mubr.f32.mxu0 0.0
    %1823 = vmatmul.mubr.f32.gmra.mrb[0].mxu0 %v1756
    %v1824 = vpop.f32.mrb[0].mxu0
    %v1825 = vadd.f32 0.0, %v1824
    %v1826 = vpop.f32.mrb[0].mxu0
    %1827 = vdwg.mxu0
    %v1828 = vadd.f32 %v387, %v1750
    %v1829 = vxor.u32 %v1828, 2147483648
    %v1830 = vmul.f32 %v1829, 1.442695
    %v1831 = vpow.pop %v1830
    %v1832 = vadd.f32 %v1831, 1.0
    %v1833 = vrcp.pop %v1832
    %v1834 = vmul.f32 1.0, %v1833
    %v1835 = vtanh.pop %v1828
    %v1836 = vmul.f32 %v1834, %v1576
    %1838 = vrot.lane.b32.xlu0 %v1835, 64
    %v1839 = vpop.permute.xlu0 %1838
    %v1841 = vmul.f32 %v1834, %v1839
    %1843 = vrot.lane.b32.xlu0 %v1841, 32
    %v1844 = vpop.permute.xlu0 %1843
    %v1846 = vadd.f32 %v1836, %v1844
    %v1847 = vtanh.pop %v1846
    %1849 = vrot.lane.b32.xlu0 %v1847, 64
    %v1850 = vpop.permute.xlu0 %1849
    %v1852 = vmul.f32 %v1834, %v1850
    %1854 = vrot.lane.b32.xlu0 %v1852, 32
    %v1855 = vpop.permute.xlu0 %1854
    %v1856 = vsel %vm506, %v1855, 0
    %1858 = vmatprep.subr.mxu0 0.0
    %1859 = vmatpush1.msra.mxu0 %v468
    %1860 = vmatprep.subr.mxu0 0.0
    %1861 = vmatpush1.msra.mxu0 %v469
    %1862 = vmatprep.subr.mxu0 0.0
    %1863 = vmatpush1.msra.mxu0 %v470
    %1864 = vmatprep.subr.mxu0 0.0
    %1865 = vmatpush1.msra.mxu0 %v471
    %1866 = vmatprep.subr.mxu0 0.0
    %1867 = vmatpush1.msra.mxu0 0.0
    %1868 = vmatprep.subr.mxu0 0.0
    %1869 = vmatpush1.msra.mxu0 0.0
    %1870 = vmatprep.subr.mxu0 0.0
    %1871 = vmatpush1.msra.mxu0 0.0
    %1872 = vmatprep.subr.mxu0 0.0
    %1873 = vmatpush1.msra.mxu0 0.0
    %1874 = vmatprep.subr.mxu0 0.0
    %1875 = vmatpush1.msra.mxu0 0.0
    %1876 = vmatprep.subr.mxu0 0.0
    %1877 = vmatpush1.msra.mxu0 0.0
    %1878 = vmatprep.subr.mxu0 0.0
    %1879 = vmatpush1.msra.mxu0 0.0
    %1880 = vmatprep.subr.mxu0 0.0
    %1881 = vmatpush1.msra.mxu0 0.0
    %1882 = vmatprep.subr.mxu0 0.0
    %1883 = vmatpush1.msra.mxu0 0.0
    %1884 = vmatprep.subr.mxu0 0.0
    %1885 = vmatpush1.msra.mxu0 0.0
    %1886 = vmatprep.subr.mxu0 0.0
    %1887 = vmatpush1.msra.mxu0 0.0
    %1888 = vmatprep.subr.mxu0 0.0
    %1889 = vmatpush1.msra.mxu0 0.0
    %1890 = vmatprep.subr.mxu0 0.0
    %1891 = vmatpush1.msra.mxu0 0.0
    %1892 = vmatprep.subr.mxu0 0.0
    %1893 = vmatpush1.msra.mxu0 0.0
    %1894 = vmatprep.subr.mxu0 0.0
    %1895 = vmatpush1.msra.mxu0 0.0
    %1896 = vmatprep.subr.mxu0 0.0
    %1897 = vmatpush1.msra.mxu0 0.0
    %1898 = vmatprep.subr.mxu0 0.0
    %1899 = vmatpush1.msra.mxu0 0.0
    %1900 = vmatprep.subr.mxu0 0.0
    %1901 = vmatpush1.msra.mxu0 0.0
    %1902 = vmatprep.subr.mxu0 0.0
    %1903 = vmatpush1.msra.mxu0 0.0
    %1904 = vmatprep.subr.mxu0 0.0
    %1905 = vmatpush1.msra.mxu0 0.0
    %1906 = vmatprep.subr.mxu0 0.0
    %1907 = vmatpush1.msra.mxu0 0.0
    %1908 = vmatprep.subr.mxu0 0.0
    %1909 = vmatpush1.msra.mxu0 0.0
    %1910 = vmatprep.subr.mxu0 0.0
    %1911 = vmatpush1.msra.mxu0 0.0
    %1912 = vmatprep.subr.mxu0 0.0
    %1913 = vmatpush1.msra.mxu0 0.0
    %1914 = vmatprep.subr.mxu0 0.0
    %1915 = vmatpush1.msra.mxu0 0.0
    %1916 = vmatprep.subr.mxu0 0.0
    %1917 = vmatpush1.msra.mxu0 0.0
    %1918 = vmatprep.subr.mxu0 0.0
    %1919 = vmatpush1.msra.mxu0 0.0
    %1920 = vmatprep.subr.mxu0 0.0
    %1921 = vmatpush1.msra.mxu0 0.0
    %1922 = vmatprep.mubr.f32.mxu0 0.0
    %1923 = vmatmul.mubr.f32.gmra.mrb[0].mxu0 %v1856
    %v1924 = vpop.f32.mrb[0].mxu0
    %v1925 = vadd.f32 %v501, %v1924
    %v1926 = vpop.f32.mrb[0].mxu0
    %1927 = vdwg.mxu0
    %v1928 = vadd.f32 %v1925, %v1825
    %v1929 = vxor.u32 %v1928, 2147483648
    %v1930 = vmul.f32 %v1929, 1.442695
    %v1931 = vpow.pop %v1930
    %v1932 = vadd.f32 %v1931, 1.0
    %v1933 = vrcp.pop %v1932
    %v1934 = vmul.f32 1.0, %v1933
    %v1935 = vtanh.pop %v1928
    %v1936 = vmul.f32 %v1934, %v1676
    %1938 = vrot.lane.b32.xlu0 %v1935, 64
    %v1939 = vpop.permute.xlu0 %1938
    %v1941 = vmul.f32 %v1934, %v1939
    %1943 = vrot.lane.b32.xlu0 %v1941, 32
    %v1944 = vpop.permute.xlu0 %1943
    %v1946 = vadd.f32 %v1936, %v1944
    %v1947 = vtanh.pop %v1946
    %1949 = vrot.lane.b32.xlu0 %v1947, 64
    %v1950 = vpop.permute.xlu0 %1949
    %v1952 = vmul.f32 %v1934, %v1950
    %1953 = vmatprep.subr.mxu0 0.0
    %1954 = vmatpush1.msra.mxu0 %v460
    %1955 = vmatprep.subr.mxu0 0.0
    %1956 = vmatpush1.msra.mxu0 %v461
    %1957 = vmatprep.subr.mxu0 0.0
    %1958 = vmatpush1.msra.mxu0 %v462
    %1959 = vmatprep.subr.mxu0 0.0
    %1960 = vmatpush1.msra.mxu0 %v463
    %1961 = vmatprep.subr.mxu0 0.0
    %1962 = vmatpush1.msra.mxu0 0.0
    %1963 = vmatprep.subr.mxu0 0.0
    %1964 = vmatpush1.msra.mxu0 0.0
    %1965 = vmatprep.subr.mxu0 0.0
    %1966 = vmatpush1.msra.mxu0 0.0
    %1967 = vmatprep.subr.mxu0 0.0
    %1968 = vmatpush1.msra.mxu0 0.0
    %1969 = vmatprep.subr.mxu0 0.0
    %1970 = vmatpush1.msra.mxu0 0.0
    %1971 = vmatprep.subr.mxu0 0.0
    %1972 = vmatpush1.msra.mxu0 0.0
    %1973 = vmatprep.subr.mxu0 0.0
    %1974 = vmatpush1.msra.mxu0 0.0
    %1975 = vmatprep.subr.mxu0 0.0
    %1976 = vmatpush1.msra.mxu0 0.0
    %1977 = vmatprep.subr.mxu0 0.0
    %1978 = vmatpush1.msra.mxu0 0.0
    %1979 = vmatprep.subr.mxu0 0.0
    %1980 = vmatpush1.msra.mxu0 0.0
    %1981 = vmatprep.subr.mxu0 0.0
    %1982 = vmatpush1.msra.mxu0 0.0
    %1983 = vmatprep.subr.mxu0 0.0
    %1984 = vmatpush1.msra.mxu0 0.0
    %1985 = vmatprep.subr.mxu0 0.0
    %1986 = vmatpush1.msra.mxu0 0.0
    %1987 = vmatprep.subr.mxu0 0.0
    %1988 = vmatpush1.msra.mxu0 0.0
    %1989 = vmatprep.subr.mxu0 0.0
    %1990 = vmatpush1.msra.mxu0 0.0
    %1991 = vmatprep.subr.mxu0 0.0
    %1992 = vmatpush1.msra.mxu0 0.0
    %1993 = vmatprep.subr.mxu0 0.0
    %1994 = vmatpush1.msra.mxu0 0.0
    %1995 = vmatprep.subr.mxu0 0.0
    %1996 = vmatpush1.msra.mxu0 0.0
    %1997 = vmatprep.subr.mxu0 0.0
    %1998 = vmatpush1.msra.mxu0 0.0
    %1999 = vmatprep.subr.mxu0 0.0
    %2000 = vmatpush1.msra.mxu0 0.0
    %2001 = vmatprep.subr.mxu0 0.0
    %2002 = vmatpush1.msra.mxu0 0.0
    %2003 = vmatprep.subr.mxu0 0.0
    %2004 = vmatpush1.msra.mxu0 0.0
    %2005 = vmatprep.subr.mxu0 0.0
    %2006 = vmatpush1.msra.mxu0 0.0
    %2007 = vmatprep.subr.mxu0 0.0
    %2008 = vmatpush1.msra.mxu0 0.0
    %2009 = vmatprep.subr.mxu0 0.0
    %2010 = vmatpush1.msra.mxu0 0.0
    %2011 = vmatprep.subr.mxu0 0.0
    %2012 = vmatpush1.msra.mxu0 0.0
    %2013 = vmatprep.subr.mxu0 0.0
    %2014 = vmatpush1.msra.mxu0 0.0
    %2015 = vmatprep.subr.mxu0 0.0
    %2016 = vmatpush1.msra.mxu0 0.0
    %2017 = vmatprep.mubr.f32.mxu0 0.0
    %2018 = vmatmul.mubr.f32.gmra.mrb[0].mxu0 %v1856
    %v2019 = vpop.f32.mrb[0].mxu0
    %v2020 = vadd.f32 0.0, %v2019
    %v2021 = vpop.f32.mrb[0].mxu0
    %2022 = vdwg.mxu0
    %2024 = vrot.lane.b32.xlu0 %v1952, 32
    %v2025 = vpop.permute.xlu0 %2024
    %v2026 = vsel %vm506, %v2025, 0
    %2028 = vmatprep.subr.mxu0 0.0
    %2029 = vmatpush1.msra.mxu0 %v464
    %2030 = vmatprep.subr.mxu0 0.0
    %2031 = vmatpush1.msra.mxu0 %v465
    %2032 = vmatprep.subr.mxu0 0.0
    %2033 = vmatpush1.msra.mxu0 %v466
    %2034 = vmatprep.subr.mxu0 0.0
    %2035 = vmatpush1.msra.mxu0 %v467
    %2036 = vmatprep.subr.mxu0 0.0
    %2037 = vmatpush1.msra.mxu0 0.0
    %2038 = vmatprep.subr.mxu0 0.0
    %2039 = vmatpush1.msra.mxu0 0.0
    %2040 = vmatprep.subr.mxu0 0.0
    %2041 = vmatpush1.msra.mxu0 0.0
    %2042 = vmatprep.subr.mxu0 0.0
    %2043 = vmatpush1.msra.mxu0 0.0
    %2044 = vmatprep.subr.mxu0 0.0
    %2045 = vmatpush1.msra.mxu0 0.0
    %2046 = vmatprep.subr.mxu0 0.0
    %2047 = vmatpush1.msra.mxu0 0.0
    %2048 = vmatprep.subr.mxu0 0.0
    %2049 = vmatpush1.msra.mxu0 0.0
    %2050 = vmatprep.subr.mxu0 0.0
    %2051 = vmatpush1.msra.mxu0 0.0
    %2052 = vmatprep.subr.mxu0 0.0
    %2053 = vmatpush1.msra.mxu0 0.0
    %2054 = vmatprep.subr.mxu0 0.0
    %2055 = vmatpush1.msra.mxu0 0.0
    %2056 = vmatprep.subr.mxu0 0.0
    %2057 = vmatpush1.msra.mxu0 0.0
    %2058 = vmatprep.subr.mxu0 0.0
    %2059 = vmatpush1.msra.mxu0 0.0
    %2060 = vmatprep.subr.mxu0 0.0
    %2061 = vmatpush1.msra.mxu0 0.0
    %2062 = vmatprep.subr.mxu0 0.0
    %2063 = vmatpush1.msra.mxu0 0.0
    %2064 = vmatprep.subr.mxu0 0.0
    %2065 = vmatpush1.msra.mxu0 0.0
    %2066 = vmatprep.subr.mxu0 0.0
    %2067 = vmatpush1.msra.mxu0 0.0
    %2068 = vmatprep.subr.mxu0 0.0
    %2069 = vmatpush1.msra.mxu0 0.0
    %2070 = vmatprep.subr.mxu0 0.0
    %2071 = vmatpush1.msra.mxu0 0.0
    %2072 = vmatprep.subr.mxu0 0.0
    %2073 = vmatpush1.msra.mxu0 0.0
    %2074 = vmatprep.subr.mxu0 0.0
    %2075 = vmatpush1.msra.mxu0 0.0
    %2076 = vmatprep.subr.mxu0 0.0
    %2077 = vmatpush1.msra.mxu0 0.0
    %2078 = vmatprep.subr.mxu0 0.0
    %2079 = vmatpush1.msra.mxu0 0.0
    %2080 = vmatprep.subr.mxu0 0.0
    %2081 = vmatpush1.msra.mxu0 0.0
    %2082 = vmatprep.subr.mxu0 0.0
    %2083 = vmatpush1.msra.mxu0 0.0
    %2084 = vmatprep.subr.mxu0 0.0
    %2085 = vmatpush1.msra.mxu0 0.0
    %2086 = vmatprep.subr.mxu0 0.0
    %2087 = vmatpush1.msra.mxu0 0.0
    %2088 = vmatprep.subr.mxu0 0.0
    %2089 = vmatpush1.msra.mxu0 0.0
    %2090 = vmatprep.subr.mxu0 0.0
    %2091 = vmatpush1.msra.mxu0 0.0
    %2092 = vmatprep.mubr.f32.mxu0 0.0
    %2093 = vmatmul.mubr.f32.gmra.mrb[0].mxu0 %v2026
    %v2094 = vpop.f32.mrb[0].mxu0
    %v2095 = vadd.f32 0.0, %v2094
    %v2096 = vpop.f32.mrb[0].mxu0
    %2097 = vdwg.mxu0
    %v2098 = vadd.f32 %v456, %v2020
    %v2099 = vxor.u32 %v2098, 2147483648
    %v2100 = vmul.f32 %v2099, 1.442695
    %v2101 = vpow.pop %v2100
    %v2102 = vadd.f32 %v2101, 1.0
    %v2103 = vrcp.pop %v2102
    %v2104 = vmul.f32 1.0, %v2103
    %v2105 = vtanh.pop %v2098
    %v2106 = vmul.f32 %v2104, %v1846
    %2108 = vrot.lane.b32.xlu0 %v2105, 64
    %v2109 = vpop.permute.xlu0 %2108
    %v2111 = vmul.f32 %v2104, %v2109
    %2113 = vrot.lane.b32.xlu0 %v2111, 32
    %v2114 = vpop.permute.xlu0 %2113
    %v2116 = vadd.f32 %v2106, %v2114
    %v2117 = vtanh.pop %v2116
    %2119 = vrot.lane.b32.xlu0 %v2117, 64
    %v2120 = vpop.permute.xlu0 %2119
    %v2122 = vmul.f32 %v2104, %v2120
    %2124 = vrot.lane.b32.xlu0 %v2122, 32
    %v2125 = vpop.permute.xlu0 %2124
    %v2126 = vsel %vm506, %v2125, 0
    %2128 = vmatprep.subr.mxu0 0.0
    %2129 = vmatpush1.msra.mxu0 %v468
    %2130 = vmatprep.subr.mxu0 0.0
    %2131 = vmatpush1.msra.mxu0 %v469
    %2132 = vmatprep.subr.mxu0 0.0
    %2133 = vmatpush1.msra.mxu0 %v470
    %2134 = vmatprep.subr.mxu0 0.0
    %2135 = vmatpush1.msra.mxu0 %v471
    %2136 = vmatprep.subr.mxu0 0.0
    %2137 = vmatpush1.msra.mxu0 0.0
    %2138 = vmatprep.subr.mxu0 0.0
    %2139 = vmatpush1.msra.mxu0 0.0
    %2140 = vmatprep.subr.mxu0 0.0
    %2141 = vmatpush1.msra.mxu0 0.0
    %2142 = vmatprep.subr.mxu0 0.0
    %2143 = vmatpush1.msra.mxu0 0.0
    %2144 = vmatprep.subr.mxu0 0.0
    %2145 = vmatpush1.msra.mxu0 0.0
    %2146 = vmatprep.subr.mxu0 0.0
    %2147 = vmatpush1.msra.mxu0 0.0
    %2148 = vmatprep.subr.mxu0 0.0
    %2149 = vmatpush1.msra.mxu0 0.0
    %2150 = vmatprep.subr.mxu0 0.0
    %2151 = vmatpush1.msra.mxu0 0.0
    %2152 = vmatprep.subr.mxu0 0.0
    %2153 = vmatpush1.msra.mxu0 0.0
    %2154 = vmatprep.subr.mxu0 0.0
    %2155 = vmatpush1.msra.mxu0 0.0
    %2156 = vmatprep.subr.mxu0 0.0
    %2157 = vmatpush1.msra.mxu0 0.0
    %2158 = vmatprep.subr.mxu0 0.0
    %2159 = vmatpush1.msra.mxu0 0.0
    %2160 = vmatprep.subr.mxu0 0.0
    %2161 = vmatpush1.msra.mxu0 0.0
    %2162 = vmatprep.subr.mxu0 0.0
    %2163 = vmatpush1.msra.mxu0 0.0
    %2164 = vmatprep.subr.mxu0 0.0
    %2165 = vmatpush1.msra.mxu0 0.0
    %2166 = vmatprep.subr.mxu0 0.0
    %2167 = vmatpush1.msra.mxu0 0.0
    %2168 = vmatprep.subr.mxu0 0.0
    %2169 = vmatpush1.msra.mxu0 0.0
    %2170 = vmatprep.subr.mxu0 0.0
    %2171 = vmatpush1.msra.mxu0 0.0
    %2172 = vmatprep.subr.mxu0 0.0
    %2173 = vmatpush1.msra.mxu0 0.0
    %2174 = vmatprep.subr.mxu0 0.0
    %2175 = vmatpush1.msra.mxu0 0.0
    %2176 = vmatprep.subr.mxu0 0.0
    %2177 = vmatpush1.msra.mxu0 0.0
    %2178 = vmatprep.subr.mxu0 0.0
    %2179 = vmatpush1.msra.mxu0 0.0
    %2180 = vmatprep.subr.mxu0 0.0
    %2181 = vmatpush1.msra.mxu0 0.0
    %2182 = vmatprep.subr.mxu0 0.0
    %2183 = vmatpush1.msra.mxu0 0.0
    %2184 = vmatprep.subr.mxu0 0.0
    %2185 = vmatpush1.msra.mxu0 0.0
    %2186 = vmatprep.subr.mxu0 0.0
    %2187 = vmatpush1.msra.mxu0 0.0
    %2188 = vmatprep.subr.mxu0 0.0
    %2189 = vmatpush1.msra.mxu0 0.0
    %2190 = vmatprep.subr.mxu0 0.0
    %2191 = vmatpush1.msra.mxu0 0.0
    %2192 = vmatprep.mubr.f32.mxu0 0.0
    %2193 = vmatmul.mubr.f32.gmra.mrb[0].mxu0 %v2126
    %v2194 = vpop.f32.mrb[0].mxu0
    %v2195 = vadd.f32 %v501, %v2194
    %v2196 = vpop.f32.mrb[0].mxu0
    %2197 = vdwg.mxu0
    %v2198 = vadd.f32 %v2195, %v2095
    %v2199 = vxor.u32 %v2198, 2147483648
    %v2200 = vmul.f32 %v2199, 1.442695
    %v2201 = vpow.pop %v2200
    %v2202 = vadd.f32 %v2201, 1.0
    %v2203 = vrcp.pop %v2202
    %v2204 = vmul.f32 1.0, %v2203
    %v2205 = vtanh.pop %v2198
    %v2206 = vmul.f32 %v2204, %v1946
    %2208 = vrot.lane.b32.xlu0 %v2205, 64
    %v2209 = vpop.permute.xlu0 %2208
    %v2211 = vmul.f32 %v2204, %v2209
    %2213 = vrot.lane.b32.xlu0 %v2211, 32
    %v2214 = vpop.permute.xlu0 %2213
    %v2216 = vadd.f32 %v2206, %v2214
    %v2217 = vtanh.pop %v2216
    %2219 = vrot.lane.b32.xlu0 %v2217, 64
    %v2220 = vpop.permute.xlu0 %2219
    %v2222 = vmul.f32 %v2204, %v2220
    %2223 = vmatprep.subr.mxu0 0.0
    %2224 = vmatpush1.msra.mxu0 %v460
    %2225 = vmatprep.subr.mxu0 0.0
    %2226 = vmatpush1.msra.mxu0 %v461
    %2227 = vmatprep.subr.mxu0 0.0
    %2228 = vmatpush1.msra.mxu0 %v462
    %2229 = vmatprep.subr.mxu0 0.0
    %2230 = vmatpush1.msra.mxu0 %v463
    %2231 = vmatprep.subr.mxu0 0.0
    %2232 = vmatpush1.msra.mxu0 0.0
    %2233 = vmatprep.subr.mxu0 0.0
    %2234 = vmatpush1.msra.mxu0 0.0
    %2235 = vmatprep.subr.mxu0 0.0
    %2236 = vmatpush1.msra.mxu0 0.0
    %2237 = vmatprep.subr.mxu0 0.0
    %2238 = vmatpush1.msra.mxu0 0.0
    %2239 = vmatprep.subr.mxu0 0.0
    %2240 = vmatpush1.msra.mxu0 0.0
    %2241 = vmatprep.subr.mxu0 0.0
    %2242 = vmatpush1.msra.mxu0 0.0
    %2243 = vmatprep.subr.mxu0 0.0
    %2244 = vmatpush1.msra.mxu0 0.0
    %2245 = vmatprep.subr.mxu0 0.0
    %2246 = vmatpush1.msra.mxu0 0.0
    %2247 = vmatprep.subr.mxu0 0.0
    %2248 = vmatpush1.msra.mxu0 0.0
    %2249 = vmatprep.subr.mxu0 0.0
    %2250 = vmatpush1.msra.mxu0 0.0
    %2251 = vmatprep.subr.mxu0 0.0
    %2252 = vmatpush1.msra.mxu0 0.0
    %2253 = vmatprep.subr.mxu0 0.0
    %2254 = vmatpush1.msra.mxu0 0.0
    %2255 = vmatprep.subr.mxu0 0.0
    %2256 = vmatpush1.msra.mxu0 0.0
    %2257 = vmatprep.subr.mxu0 0.0
    %2258 = vmatpush1.msra.mxu0 0.0
    %2259 = vmatprep.subr.mxu0 0.0
    %2260 = vmatpush1.msra.mxu0 0.0
    %2261 = vmatprep.subr.mxu0 0.0
    %2262 = vmatpush1.msra.mxu0 0.0
    %2263 = vmatprep.subr.mxu0 0.0
    %2264 = vmatpush1.msra.mxu0 0.0
    %2265 = vmatprep.subr.mxu0 0.0
    %2266 = vmatpush1.msra.mxu0 0.0
    %2267 = vmatprep.subr.mxu0 0.0
    %2268 = vmatpush1.msra.mxu0 0.0
    %2269 = vmatprep.subr.mxu0 0.0
    %2270 = vmatpush1.msra.mxu0 0.0
    %2271 = vmatprep.subr.mxu0 0.0
    %2272 = vmatpush1.msra.mxu0 0.0
    %2273 = vmatprep.subr.mxu0 0.0
    %2274 = vmatpush1.msra.mxu0 0.0
    %2275 = vmatprep.subr.mxu0 0.0
    %2276 = vmatpush1.msra.mxu0 0.0
    %2277 = vmatprep.subr.mxu0 0.0
    %2278 = vmatpush1.msra.mxu0 0.0
    %2279 = vmatprep.subr.mxu0 0.0
    %2280 = vmatpush1.msra.mxu0 0.0
    %2281 = vmatprep.subr.mxu0 0.0
    %2282 = vmatpush1.msra.mxu0 0.0
    %2283 = vmatprep.subr.mxu0 0.0
    %2284 = vmatpush1.msra.mxu0 0.0
    %2285 = vmatprep.subr.mxu0 0.0
    %2286 = vmatpush1.msra.mxu0 0.0
    %2287 = vmatprep.mubr.f32.mxu0 0.0
    %2288 = vmatmul.mubr.f32.gmra.mrb[0].mxu0 %v2126
    %v2289 = vpop.f32.mrb[0].mxu0
    %v2290 = vadd.f32 0.0, %v2289
    %v2291 = vpop.f32.mrb[0].mxu0
    %2292 = vdwg.mxu0
    %2294 = vrot.lane.b32.xlu0 %v2222, 32
    %v2295 = vpop.permute.xlu0 %2294
    %v2296 = vsel %vm506, %v2295, 0
    %2298 = vmatprep.subr.mxu0 0.0
    %2299 = vmatpush1.msra.mxu0 %v464
    %2300 = vmatprep.subr.mxu0 0.0
    %2301 = vmatpush1.msra.mxu0 %v465
    %2302 = vmatprep.subr.mxu0 0.0
    %2303 = vmatpush1.msra.mxu0 %v466
    %2304 = vmatprep.subr.mxu0 0.0
    %2305 = vmatpush1.msra.mxu0 %v467
    %2306 = vmatprep.subr.mxu0 0.0
    %2307 = vmatpush1.msra.mxu0 0.0
    %2308 = vmatprep.subr.mxu0 0.0
    %2309 = vmatpush1.msra.mxu0 0.0
    %2310 = vmatprep.subr.mxu0 0.0
    %2311 = vmatpush1.msra.mxu0 0.0
    %2312 = vmatprep.subr.mxu0 0.0
    %2313 = vmatpush1.msra.mxu0 0.0
    %2314 = vmatprep.subr.mxu0 0.0
    %2315 = vmatpush1.msra.mxu0 0.0
    %2316 = vmatprep.subr.mxu0 0.0
    %2317 = vmatpush1.msra.mxu0 0.0
    %2318 = vmatprep.subr.mxu0 0.0
    %2319 = vmatpush1.msra.mxu0 0.0
    %2320 = vmatprep.subr.mxu0 0.0
    %2321 = vmatpush1.msra.mxu0 0.0
    %2322 = vmatprep.subr.mxu0 0.0
    %2323 = vmatpush1.msra.mxu0 0.0
    %2324 = vmatprep.subr.mxu0 0.0
    %2325 = vmatpush1.msra.mxu0 0.0
    %2326 = vmatprep.subr.mxu0 0.0
    %2327 = vmatpush1.msra.mxu0 0.0
    %2328 = vmatprep.subr.mxu0 0.0
    %2329 = vmatpush1.msra.mxu0 0.0
    %2330 = vmatprep.subr.mxu0 0.0
    %2331 = vmatpush1.msra.mxu0 0.0
    %2332 = vmatprep.subr.mxu0 0.0
    %2333 = vmatpush1.msra.mxu0 0.0
    %2334 = vmatprep.subr.mxu0 0.0
    %2335 = vmatpush1.msra.mxu0 0.0
    %2336 = vmatprep.subr.mxu0 0.0
    %2337 = vmatpush1.msra.mxu0 0.0
    %2338 = vmatprep.subr.mxu0 0.0
    %2339 = vmatpush1.msra.mxu0 0.0
    %2340 = vmatprep.subr.mxu0 0.0
    %2341 = vmatpush1.msra.mxu0 0.0
    %2342 = vmatprep.subr.mxu0 0.0
    %2343 = vmatpush1.msra.mxu0 0.0
    %2344 = vmatprep.subr.mxu0 0.0
    %2345 = vmatpush1.msra.mxu0 0.0
    %2346 = vmatprep.subr.mxu0 0.0
    %2347 = vmatpush1.msra.mxu0 0.0
    %2348 = vmatprep.subr.mxu0 0.0
    %2349 = vmatpush1.msra.mxu0 0.0
    %2350 = vmatprep.subr.mxu0 0.0
    %2351 = vmatpush1.msra.mxu0 0.0
    %2352 = vmatprep.subr.mxu0 0.0
    %2353 = vmatpush1.msra.mxu0 0.0
    %2354 = vmatprep.subr.mxu0 0.0
    %2355 = vmatpush1.msra.mxu0 0.0
    %2356 = vmatprep.subr.mxu0 0.0
    %2357 = vmatpush1.msra.mxu0 0.0
    %2358 = vmatprep.subr.mxu0 0.0
    %2359 = vmatpush1.msra.mxu0 0.0
    %2360 = vmatprep.subr.mxu0 0.0
    %2361 = vmatpush1.msra.mxu0 0.0
    %2362 = vmatprep.mubr.f32.mxu0 0.0
    %2363 = vmatmul.mubr.f32.gmra.mrb[0].mxu0 %v2296
    %v2364 = vpop.f32.mrb[0].mxu0
    %v2365 = vadd.f32 0.0, %v2364
    %v2366 = vpop.f32.mrb[0].mxu0
    %2367 = vdwg.mxu0
    %v2368 = vadd.f32 %v458, %v2290
    %v2369 = vxor.u32 %v2368, 2147483648
    %v2370 = vmul.f32 %v2369, 1.442695
    %v2371 = vpow.pop %v2370
    %v2372 = vadd.f32 %v2371, 1.0
    %v2373 = vrcp.pop %v2372
    %v2374 = vmul.f32 1.0, %v2373
    %v2375 = vtanh.pop %v2368
    %v2376 = vmul.f32 %v2374, %v2116
    %2378 = vrot.lane.b32.xlu0 %v2375, 64
    %v2379 = vpop.permute.xlu0 %2378
    %v2381 = vmul.f32 %v2374, %v2379
    %2383 = vrot.lane.b32.xlu0 %v2381, 32
    %v2384 = vpop.permute.xlu0 %2383
    %v2386 = vadd.f32 %v2376, %v2384
    %v2387 = vtanh.pop %v2386
    %2389 = vrot.lane.b32.xlu0 %v2387, 64
    %v2390 = vpop.permute.xlu0 %2389
    %v2392 = vmul.f32 %v2374, %v2390
    %2394 = vrot.lane.b32.xlu0 %v2392, 32
    %v2395 = vpop.permute.xlu0 %2394
    %v2396 = vsel %vm506, %v2395, 0
    %2398 = vmatprep.subr.mxu0 0.0
    %2399 = vmatpush1.msra.mxu0 %v468
    %2400 = vmatprep.subr.mxu0 0.0
    %2401 = vmatpush1.msra.mxu0 %v469
    %2402 = vmatprep.subr.mxu0 0.0
    %2403 = vmatpush1.msra.mxu0 %v470
    %2404 = vmatprep.subr.mxu0 0.0
    %2405 = vmatpush1.msra.mxu0 %v471
    %2406 = vmatprep.subr.mxu0 0.0
    %2407 = vmatpush1.msra.mxu0 0.0
    %2408 = vmatprep.subr.mxu0 0.0
    %2409 = vmatpush1.msra.mxu0 0.0
    %2410 = vmatprep.subr.mxu0 0.0
    %2411 = vmatpush1.msra.mxu0 0.0
    %2412 = vmatprep.subr.mxu0 0.0
    %2413 = vmatpush1.msra.mxu0 0.0
    %2414 = vmatprep.subr.mxu0 0.0
    %2415 = vmatpush1.msra.mxu0 0.0
    %2416 = vmatprep.subr.mxu0 0.0
    %2417 = vmatpush1.msra.mxu0 0.0
    %2418 = vmatprep.subr.mxu0 0.0
    %2419 = vmatpush1.msra.mxu0 0.0
    %2420 = vmatprep.subr.mxu0 0.0
    %2421 = vmatpush1.msra.mxu0 0.0
    %2422 = vmatprep.subr.mxu0 0.0
    %2423 = vmatpush1.msra.mxu0 0.0
    %2424 = vmatprep.subr.mxu0 0.0
    %2425 = vmatpush1.msra.mxu0 0.0
    %2426 = vmatprep.subr.mxu0 0.0
    %2427 = vmatpush1.msra.mxu0 0.0
    %2428 = vmatprep.subr.mxu0 0.0
    %2429 = vmatpush1.msra.mxu0 0.0
    %2430 = vmatprep.subr.mxu0 0.0
    %2431 = vmatpush1.msra.mxu0 0.0
    %2432 = vmatprep.subr.mxu0 0.0
    %2433 = vmatpush1.msra.mxu0 0.0
    %2434 = vmatprep.subr.mxu0 0.0
    %2435 = vmatpush1.msra.mxu0 0.0
    %2436 = vmatprep.subr.mxu0 0.0
    %2437 = vmatpush1.msra.mxu0 0.0
    %2438 = vmatprep.subr.mxu0 0.0
    %2439 = vmatpush1.msra.mxu0 0.0
    %2440 = vmatprep.subr.mxu0 0.0
    %2441 = vmatpush1.msra.mxu0 0.0
    %2442 = vmatprep.subr.mxu0 0.0
    %2443 = vmatpush1.msra.mxu0 0.0
    %2444 = vmatprep.subr.mxu0 0.0
    %2445 = vmatpush1.msra.mxu0 0.0
    %2446 = vmatprep.subr.mxu0 0.0
    %2447 = vmatpush1.msra.mxu0 0.0
    %2448 = vmatprep.subr.mxu0 0.0
    %2449 = vmatpush1.msra.mxu0 0.0
    %2450 = vmatprep.subr.mxu0 0.0
    %2451 = vmatpush1.msra.mxu0 0.0
    %2452 = vmatprep.subr.mxu0 0.0
    %2453 = vmatpush1.msra.mxu0 0.0
    %2454 = vmatprep.subr.mxu0 0.0
    %2455 = vmatpush1.msra.mxu0 0.0
    %2456 = vmatprep.subr.mxu0 0.0
    %2457 = vmatpush1.msra.mxu0 0.0
    %2458 = vmatprep.subr.mxu0 0.0
    %2459 = vmatpush1.msra.mxu0 0.0
    %2460 = vmatprep.subr.mxu0 0.0
    %2461 = vmatpush1.msra.mxu0 0.0
    %2462 = vmatprep.mubr.f32.mxu0 0.0
    %2463 = vmatmul.mubr.f32.gmra.mrb[0].mxu0 %v2396
    %v2464 = vpop.f32.mrb[0].mxu0
    %v2465 = vadd.f32 %v501, %v2464
    %v2466 = vpop.f32.mrb[0].mxu0
    %2467 = vdwg.mxu0
    %v2468 = vadd.f32 %v2465, %v2365
    %v2469 = vxor.u32 %v2468, 2147483648
    %v2470 = vmul.f32 %v2469, 1.442695
    %v2471 = vpow.pop %v2470
    %v2472 = vadd.f32 %v2471, 1.0
    %v2473 = vrcp.pop %v2472
    %v2474 = vmul.f32 1.0, %v2473
    %v2475 = vtanh.pop %v2468
    %v2476 = vmul.f32 %v2474, %v2216
    %2478 = vrot.lane.b32.xlu0 %v2475, 64
    %v2479 = vpop.permute.xlu0 %2478
    %v2481 = vmul.f32 %v2474, %v2479
    %2483 = vrot.lane.b32.xlu0 %v2481, 32
    %v2484 = vpop.permute.xlu0 %2483
    %v2486 = vadd.f32 %v2476, %v2484
    %v2487 = vtanh.pop %v2486
    %2489 = vrot.lane.b32.xlu0 %v2487, 64
    %v2490 = vpop.permute.xlu0 %2489
    %v2492 = vmul.f32 %v2474, %v2490
    %v2493 = vrot.slane %v2222, 6
    %v2496 = vrot.slane %v2492, 7
    %vm2498 = vcmask 1040384
    %v2499 = vsel %vm2498, %v2493, %v2496
    %v2500 = vld [vmem:[%s8] sm:$0x1]
    %v2502 = vlaneseq
    %v2503 = vshrl.u32 %v2502, 7
    %v2504 = vsub.s32 0, %v2503
    %v2505 = vrot.slane %v2500, %v2504
    %2506 = vrot.lane.b32.xlu0 %v2505, 96
    %v2507 = vpop.permute.xlu0 %2506
    %v2509 = vmul.f32 %v2499, %v2507
    %2511 = vrot.lane.b32.xlu0 %v2509, 32
    %v2512 = vpop.permute.xlu0 %2511
    %v2514 = vsel %vm506, %v2512, 0.0
    %2515 = vadd.xlane.f32.xlu0 %v2514
    %v2516 = vpop.xlane.xlu0 %2515
    %v2517 = vstv %s110
    %v2518 = vadd.f32 %v2516, %v2517
    %vm2519 = vcmask 7168
    %2520 = vst.msk [vmem:[%s9] sm:$0xff] %vm2519, %v2518
    // Predicated region
    $region62: #{tpu_custom_call.1} parent=1 // pred_check
      _
    $region63: #{tpu_custom_call.1} parent=1 // pred_check_branch
      %2522 = sbr.rel (0) target = $region65
    $region64: #{tpu_custom_call.1} parent=1 // pred_region
      _
    $region65: #{tpu_custom_call.1} parent=1 // pred_fallthru
      _
    // Predicated region
    $region66: #{tpu_custom_call.1} parent=1 // pred_check
      _
    $region67: #{tpu_custom_call.1} parent=1 // pred_check_branch
      %2524 = sbr.rel (0) target = $region69
    $region68: #{tpu_custom_call.1} parent=1 // pred_region
      _
    $region69: #{tpu_custom_call.1} parent=1 // pred_fallthru
      _
    %2525 = vsyncpa [#allocation3], 1
    %2526 = vsyncpa [#allocation7], 1
    %2527 = vsyncpa [#allocation10], 1
    %2528 = vsyncpa [#allocation4], 1

</llo_original>
